<compile_context>
chip_gen: v6e
topology: v6e:2x2x1
jax: 0.10.0
libtpu: 0.0.40
codegen_flags: <defaults>
</compile_context>

<pallas_src>
import functools

import jax
import jax.numpy as jnp
import numpy as np
from jax.experimental import pallas as pl
from jax.experimental.pallas import tpu as pltpu


def attention_kernel(x_ref, wq_ref, wk_ref, wv_ref, wo_ref, b_ref, o_ref, *,
                     heads, dim_head, seq, tile):
    H, E, N, T = heads, dim_head, seq, tile
    M = T * N

    xf = x_ref[...]                                    # (M, D)
    xb = jnp.broadcast_to(xf[None], (H,) + xf.shape)   # (H, M, D) head batch

    # Batched per-head projections (softmax scale already folded into Wq).
    q = jnp.einsum('hmd,hde->hme', xb, wq_ref[...],
                   preferred_element_type=jnp.float32)          # (H, M, E)
    k = jnp.einsum('hmd,hde->hme', xb, wk_ref[...],
                   preferred_element_type=jnp.float32)
    v = jnp.einsum('hmd,hde->hme', xb, wv_ref[...],
                   preferred_element_type=jnp.float32)

    # (H, T*N, E) -> (H*T, N, E): pure leading-dim regrouping (same row order).
    q = q.reshape(H * T, N, E)
    k = k.reshape(H * T, N, E)
    v = v.reshape(H * T, N, E)

    # Scaled-dot-product attention, batched over (head, tile).
    dots = jnp.einsum('bne,bme->bnm', q, k,
                      preferred_element_type=jnp.float32)       # (H*T, N, N)
    dots = dots - jnp.max(dots, axis=-1, keepdims=True)
    p = jnp.exp(dots)
    inv = pl.reciprocal(jnp.sum(p, axis=-1, keepdims=True), approx=True)
    attn = p * inv
    ctx = jnp.einsum('bnm,bme->bne', attn, v,
                     preferred_element_type=jnp.float32)        # (H*T, N, E)

    # Output projection: per-head matmul, then sum heads (VPU adds) + bias.
    ctx = ctx.reshape(H, M, E)
    yh = jnp.einsum('hme,hed->hmd', ctx, wo_ref[...],
                    preferred_element_type=jnp.float32)         # (H, M, D)
    y = jnp.sum(yh, axis=0) + b_ref[...]                        # (M, D)
    o_ref[...] = y.astype(o_ref.dtype)


def _pick_group_tile(G, N, cap=16):
    """Largest divisor T of G (T <= cap) such that the (T*N, D) block satisfies
    the sublane constraint, preferring a grid length >= 2 (v7x megacore)."""
    divs = [t for t in range(1, G + 1)
            if G % t == 0 and t <= cap and ((t * N) % 8 == 0 or t == G)]
    if not divs:
        return G
    pref = [t for t in divs if G // t >= 2]
    return max(pref) if pref else max(divs)


def attention_forward(x, w_qkv, w_out, b_out, *, heads, dim_head):
    B, P, N, D = x.shape
    H, E = heads, dim_head
    inner = H * E
    scale = E ** -0.5
    G = B * P
    T = _pick_group_tile(G, N)
    grid_len = G // T

    # Static weight restructuring (free): heads become a leading batch dim.
    # w_qkv columns are laid out as (3, H, E); w_out rows as (H, E).
    w3 = w_qkv.reshape(D, 3, H, E).transpose(1, 2, 0, 3)   # (3, H, D, E)
    wq = w3[0] * scale          # fold softmax scale into the Q projection
    wk = w3[1]
    wv = w3[2]
    woh = w_out.reshape(H, E, D)                           # (H, E, D)
    b2 = b_out.reshape(1, D)

    x2 = x.reshape(G * N, D)    # row g*N + n  <->  (b, p, n); free reshape

    kern = functools.partial(attention_kernel,
                             heads=H, dim_head=E, seq=N, tile=T)

    out = pl.pallas_call(
        kern,
        out_shape=jax.ShapeDtypeStruct((G * N, D), x.dtype),
        grid_spec=pltpu.PrefetchScalarGridSpec(
            num_scalar_prefetch=0,
            grid=(grid_len,),
            in_specs=[
                pl.BlockSpec((T * N, D), lambda i: (i, 0)),      # x slab
                pl.BlockSpec((H, D, E), lambda i: (0, 0, 0)),    # Wq (scaled)
                pl.BlockSpec((H, D, E), lambda i: (0, 0, 0)),    # Wk
                pl.BlockSpec((H, D, E), lambda i: (0, 0, 0)),    # Wv
                pl.BlockSpec((H, E, D), lambda i: (0, 0, 0)),    # W_out
                pl.BlockSpec((1, D), lambda i: (0, 0)),          # b_out
            ],
            out_specs=pl.BlockSpec((T * N, D), lambda i: (i, 0)),
        ),
        compiler_params=pltpu.CompilerParams(
            dimension_semantics=("parallel",)),
    )(x2, wq, wk, wv, woh, b2)

    return out.reshape(B, P, N, D)


def attention_reference(x, w_qkv, w_out, b_out, *, heads, dim_head):
    """Pure-JAX reference matching the PyTorch forward."""
    B, P, N, D = x.shape
    inner = heads * dim_head
    qkv = x @ w_qkv                                        # (B,P,N,3*inner)
    q, k, v = jnp.split(qkv, 3, axis=-1)

    def split_heads(t):                                    # 'b p n (h d) -> b p h n d'
        return t.reshape(B, P, N, heads, dim_head).transpose(0, 1, 3, 2, 4)

    q, k, v = split_heads(q), split_heads(k), split_heads(v)
    dots = jnp.einsum('bphnd,bphmd->bphnm', q, k) * (dim_head ** -0.5)
    attn = jax.nn.softmax(dots, axis=-1)
    out = jnp.einsum('bphnm,bphmd->bphnd', attn, v)
    out = out.transpose(0, 1, 3, 2, 4).reshape(B, P, N, inner)  # 'b p h n d -> b p n (h d)'
    return out @ w_out + b_out


if __name__ == "__main__":
    B, P, N, DIM = 2, 2, 8, 32
    HEADS, DIM_HEAD = 4, 16
    INNER = HEADS * DIM_HEAD

    key = jax.random.PRNGKey(0)
    kx, kqkv, kwo, kbo = jax.random.split(key, 4)

    x = jax.random.normal(kx, (B, P, N, DIM), dtype=jnp.float32)
    # Linear weights stored pre-transposed:
    # to_qkv: (DIM, 3*INNER) no bias; to_out: (INNER, DIM) with bias (DIM,).
    w_qkv = 0.02 * jax.random.normal(kqkv, (DIM, 3 * INNER), dtype=jnp.float32)
    w_out = 0.02 * jax.random.normal(kwo, (INNER, DIM), dtype=jnp.float32)
    b_out = 0.02 * jax.random.normal(kbo, (DIM,), dtype=jnp.float32)

    y = attention_forward(x, w_qkv, w_out, b_out, heads=HEADS, dim_head=DIM_HEAD)
    y = jax.block_until_ready(y)

    y_ref = attention_reference(x, w_qkv, w_out, b_out,
                                heads=HEADS, dim_head=DIM_HEAD)
    # Tolerance loosened slightly vs. exact f32 because the softmax denominator
    # uses the EUP approximate reciprocal (pl.reciprocal(approx=True)).
    np.testing.assert_allclose(np.asarray(y), np.asarray(y_ref),
                               rtol=1e-2, atol=1e-3)

    print("KERNEL_OK")
</pallas_src>

<mosaic_0001>
module attributes {stable_mosaic.version = 11 : i64} {
  func.func @attention_kernel(%arg0: i32, %arg1: memref<16x32xf32, #tpu.memory_space<vmem>>, %arg2: memref<4x32x16xf32, #tpu.memory_space<vmem>>, %arg3: memref<4x32x16xf32, #tpu.memory_space<vmem>>, %arg4: memref<4x32x16xf32, #tpu.memory_space<vmem>>, %arg5: memref<4x16x32xf32, #tpu.memory_space<vmem>>, %arg6: memref<1x32xf32, #tpu.memory_space<vmem>>, %arg7: memref<16x32xf32, #tpu.memory_space<vmem>>) attributes {dimension_semantics = [#tpu.dimension_semantics<parallel>], iteration_bounds = array<i64: 2>, scalar_prefetch = 0 : i64, scratch_operands = 0 : i64, tpu.core_type = #tpu.core_type<tc>, window_params = [{transform_indices = @transform_0, window_bounds = array<i64: 16, 32>}, {pipeline_mode = #tpu.pipeline_mode<synchronous>, transform_indices = @transform_1, window_bounds = array<i64: 4, 32, 16>}, {pipeline_mode = #tpu.pipeline_mode<synchronous>, transform_indices = @transform_2, window_bounds = array<i64: 4, 32, 16>}, {pipeline_mode = #tpu.pipeline_mode<synchronous>, transform_indices = @transform_3, window_bounds = array<i64: 4, 32, 16>}, {pipeline_mode = #tpu.pipeline_mode<synchronous>, transform_indices = @transform_4, window_bounds = array<i64: 4, 16, 32>}, {pipeline_mode = #tpu.pipeline_mode<synchronous>, transform_indices = @transform_5, window_bounds = array<i64: 1, 32>}, {transform_indices = @transform_6, window_bounds = array<i64: 16, 32>}]} {
    %c0 = arith.constant 0 : index
    %c0_0 = arith.constant 0 : index
    %0 = vector.load %arg1[%c0, %c0_0] : memref<16x32xf32, #tpu.memory_space<vmem>>, vector<16x32xf32>
    %1 = vector.shape_cast %0 : vector<16x32xf32> to vector<1x16x32xf32>
    %2 = vector.shape_cast %1 : vector<1x16x32xf32> to vector<1x16x32xf32>
    %3 = vector.broadcast %2 : vector<1x16x32xf32> to vector<4x16x32xf32>
    %c0_1 = arith.constant 0 : index
    %c0_2 = arith.constant 0 : index
    %c0_3 = arith.constant 0 : index
    %4 = vector.load %arg2[%c0_1, %c0_2, %c0_3] : memref<4x32x16xf32, #tpu.memory_space<vmem>>, vector<4x32x16xf32>
    "tpu.trace_start"() <{level = 10 : i32, message = "hmd,hde->hme"}> : () -> ()
    %cst = arith.constant dense<0.000000e+00> : vector<4x16x16xf32>
    %5 = tpu.matmul %3, %4, %cst {dimension_numbers = #tpu.dot_dimension_numbers<[2], [1], [1], [2], [0, 0, 0, 1, 1, 2], [0], [0]>} : vector<4x16x32xf32>, vector<4x32x16xf32>, vector<4x16x16xf32> -> vector<4x16x16xf32>
    "tpu.trace_stop"() : () -> ()
    %c0_4 = arith.constant 0 : index
    %c0_5 = arith.constant 0 : index
    %c0_6 = arith.constant 0 : index
    %6 = vector.load %arg3[%c0_4, %c0_5, %c0_6] : memref<4x32x16xf32, #tpu.memory_space<vmem>>, vector<4x32x16xf32>
    "tpu.trace_start"() <{level = 10 : i32, message = "hmd,hde->hme"}> : () -> ()
    %cst_7 = arith.constant dense<0.000000e+00> : vector<4x16x16xf32>
    %7 = tpu.matmul %3, %6, %cst_7 {dimension_numbers = #tpu.dot_dimension_numbers<[2], [1], [1], [2], [0, 0, 0, 1, 1, 2], [0], [0]>} : vector<4x16x32xf32>, vector<4x32x16xf32>, vector<4x16x16xf32> -> vector<4x16x16xf32>
    "tpu.trace_stop"() : () -> ()
    %c0_8 = arith.constant 0 : index
    %c0_9 = arith.constant 0 : index
    %c0_10 = arith.constant 0 : index
    %8 = vector.load %arg4[%c0_8, %c0_9, %c0_10] : memref<4x32x16xf32, #tpu.memory_space<vmem>>, vector<4x32x16xf32>
    "tpu.trace_start"() <{level = 10 : i32, message = "hmd,hde->hme"}> : () -> ()
    %cst_11 = arith.constant dense<0.000000e+00> : vector<4x16x16xf32>
    %9 = tpu.matmul %3, %8, %cst_11 {dimension_numbers = #tpu.dot_dimension_numbers<[2], [1], [1], [2], [0, 0, 0, 1, 1, 2], [0], [0]>} : vector<4x16x32xf32>, vector<4x32x16xf32>, vector<4x16x16xf32> -> vector<4x16x16xf32>
    "tpu.trace_stop"() : () -> ()
    %10 = vector.shape_cast %5 : vector<4x16x16xf32> to vector<8x8x16xf32>
    %11 = vector.shape_cast %7 : vector<4x16x16xf32> to vector<8x8x16xf32>
    %12 = vector.shape_cast %9 : vector<4x16x16xf32> to vector<8x8x16xf32>
    "tpu.trace_start"() <{level = 10 : i32, message = "bne,bme->bnm"}> : () -> ()
    %cst_12 = arith.constant dense<0.000000e+00> : vector<8x8x8xf32>
    %13 = tpu.matmul %10, %11, %cst_12 {dimension_numbers = #tpu.dot_dimension_numbers<[2], [2], [1], [1], [0, 0, 0, 1, 1, 1], [0], [0]>} : vector<8x8x16xf32>, vector<8x8x16xf32>, vector<8x8x8xf32> -> vector<8x8x8xf32>
    "tpu.trace_stop"() : () -> ()
    %cst_13 = arith.constant dense<0xFF800000> : vector<8x8xf32>
    %14 = vector.multi_reduction <maximumf>, %13, %cst_13 [2] : vector<8x8x8xf32> to vector<8x8xf32>
    %15 = vector.shape_cast %14 : vector<8x8xf32> to vector<8x8x1xf32>
    %16 = vector.broadcast %15 : vector<8x8x1xf32> to vector<8x8x8xf32>
    %17 = arith.subf %13, %16 : vector<8x8x8xf32>
    %18 = math.exp %17 : vector<8x8x8xf32>
    %cst_14 = arith.constant dense<0.000000e+00> : vector<8x8xf32>
    %19 = vector.multi_reduction <add>, %18, %cst_14 [2] : vector<8x8x8xf32> to vector<8x8xf32>
    %20 = vector.shape_cast %19 : vector<8x8xf32> to vector<8x8x1xf32>
    %21 = tpu.reciprocal %20 {approx = true} : vector<8x8x1xf32> -> vector<8x8x1xf32>
    %22 = vector.broadcast %21 : vector<8x8x1xf32> to vector<8x8x8xf32>
    %23 = arith.mulf %18, %22 : vector<8x8x8xf32>
    "tpu.trace_start"() <{level = 10 : i32, message = "bnm,bme->bne"}> : () -> ()
    %cst_15 = arith.constant dense<0.000000e+00> : vector<8x8x16xf32>
    %24 = tpu.matmul %23, %12, %cst_15 {dimension_numbers = #tpu.dot_dimension_numbers<[2], [1], [1], [2], [0, 0, 0, 1, 1, 2], [0], [0]>} : vector<8x8x8xf32>, vector<8x8x16xf32>, vector<8x8x16xf32> -> vector<8x8x16xf32>
    "tpu.trace_stop"() : () -> ()
    %25 = vector.shape_cast %24 : vector<8x8x16xf32> to vector<4x16x16xf32>
    %c0_16 = arith.constant 0 : index
    %c0_17 = arith.constant 0 : index
    %c0_18 = arith.constant 0 : index
    %26 = vector.load %arg5[%c0_16, %c0_17, %c0_18] : memref<4x16x32xf32, #tpu.memory_space<vmem>>, vector<4x16x32xf32>
    "tpu.trace_start"() <{level = 10 : i32, message = "hme,hed->hmd"}> : () -> ()
    %cst_19 = arith.constant dense<0.000000e+00> : vector<4x16x32xf32>
    %27 = tpu.matmul %25, %26, %cst_19 {dimension_numbers = #tpu.dot_dimension_numbers<[2], [1], [1], [2], [0, 0, 0, 1, 1, 2], [0], [0]>} : vector<4x16x16xf32>, vector<4x16x32xf32>, vector<4x16x32xf32> -> vector<4x16x32xf32>
    "tpu.trace_stop"() : () -> ()
    %cst_20 = arith.constant dense<0.000000e+00> : vector<16x32xf32>
    %28 = vector.multi_reduction <add>, %27, %cst_20 [0] : vector<4x16x32xf32> to vector<16x32xf32>
    %c0_21 = arith.constant 0 : index
    %c0_22 = arith.constant 0 : index
    %29 = vector.load %arg6[%c0_21, %c0_22] : memref<1x32xf32, #tpu.memory_space<vmem>>, vector<1x32xf32>
    %30 = vector.broadcast %29 : vector<1x32xf32> to vector<16x32xf32>
    %31 = arith.addf %28, %30 : vector<16x32xf32>
    %c0_23 = arith.constant 0 : index
    %c0_24 = arith.constant 0 : index
    %32 = vector.load %arg7[%c0_23, %c0_24] : memref<16x32xf32, #tpu.memory_space<vmem>>, vector<16x32xf32>
    tpu.vector_store %arg7[%c0_23, %c0_24], %31 {strides = array<i32>} : memref<16x32xf32, #tpu.memory_space<vmem>>, vector<16x32xf32>,
    return
  }
  func.func @transform_0(%arg0: i32) -> (i32, i32) {
    %c0_i32 = arith.constant 0 : i32
    %c0_i32_0 = arith.constant 0 : i32
    return %arg0, %c0_i32 : i32, i32
  }
  func.func @transform_1(%arg0: i32) -> (i32, i32, i32) {
    %c0_i32 = arith.constant 0 : i32
    %c0_i32_0 = arith.constant 0 : i32
    %c0_i32_1 = arith.constant 0 : i32
    %c0_i32_2 = arith.constant 0 : i32
    return %c0_i32, %c0_i32_0, %c0_i32_1 : i32, i32, i32
  }
  func.func @transform_2(%arg0: i32) -> (i32, i32, i32) {
    %c0_i32 = arith.constant 0 : i32
    %c0_i32_0 = arith.constant 0 : i32
    %c0_i32_1 = arith.constant 0 : i32
    %c0_i32_2 = arith.constant 0 : i32
    return %c0_i32, %c0_i32_0, %c0_i32_1 : i32, i32, i32
  }
  func.func @transform_3(%arg0: i32) -> (i32, i32, i32) {
    %c0_i32 = arith.constant 0 : i32
    %c0_i32_0 = arith.constant 0 : i32
    %c0_i32_1 = arith.constant 0 : i32
    %c0_i32_2 = arith.constant 0 : i32
    return %c0_i32, %c0_i32_0, %c0_i32_1 : i32, i32, i32
  }
  func.func @transform_4(%arg0: i32) -> (i32, i32, i32) {
    %c0_i32 = arith.constant 0 : i32
    %c0_i32_0 = arith.constant 0 : i32
    %c0_i32_1 = arith.constant 0 : i32
    %c0_i32_2 = arith.constant 0 : i32
    return %c0_i32, %c0_i32_0, %c0_i32_1 : i32, i32, i32
  }
  func.func @transform_5(%arg0: i32) -> (i32, i32) {
    %c0_i32 = arith.constant 0 : i32
    %c0_i32_0 = arith.constant 0 : i32
    %c0_i32_1 = arith.constant 0 : i32
    return %c0_i32, %c0_i32_0 : i32, i32
  }
  func.func @transform_6(%arg0: i32) -> (i32, i32) {
    %c0_i32 = arith.constant 0 : i32
    %c0_i32_0 = arith.constant 0 : i32
    return %arg0, %c0_i32 : i32, i32
  }
}

</mosaic_0001>

<llo_original>
// kernel: tpu_custom_call.1
$region0: #{tpu_custom_call.1}
  #allocation0 [shape = 'u32[]', space=smem, size = 0x4, offset = 0x4, fixed_abs, tag = 'smem constant byte address 0x4 - core index']
  #allocation1 [shape = 'u32[144,128]{1,0:T(1,128)}', space=vmem, size = 0x12000, scoped, tag = 'internal scratch']
  %s0 = inlined_call_operand.vmem [shape: f32[32,32], index: 0, kind: input, shape index: {}]
  %s1 = inlined_call_operand.vmem [shape: f32[4,32,16], index: 1, kind: input, shape index: {}]
  %s2 = inlined_call_operand.vmem [shape: f32[4,32,16], index: 2, kind: input, shape index: {}]
  %s3 = inlined_call_operand.vmem [shape: f32[4,32,16], index: 3, kind: input, shape index: {}]
  %s4 = inlined_call_operand.vmem [shape: f32[4,16,32], index: 4, kind: input, shape index: {}]
  %s5 = inlined_call_operand.vmem [shape: f32[1,32], index: 5, kind: input, shape index: {}]
  %s6 = inlined_call_operand.hbm [shape: f32[32,32], index: 6, kind: output, shape index: {}]
  %s7 = sld [smem:[#allocation0]]
  $region57: #{tpu_custom_call.1} parent=0
    _
  %s9 = ssub.s32 1, %s7
  %s10 = scalar_select 0, %s9, %s7
  $region1: #{tpu_custom_call.1} parent=0
    #allocation2 [shape = 'u8[16384]{0}', space=vmem, size = 0x4000, scoped, tag = 'output window, operand 0']
    #allocation3 [shape = 's32[2]{0}', space=sflag, size = 0x8, scoped, tag = 'scoped memory for tpu_custom_call.1']
    %11 = vsyncpa [#allocation3], 0
    %s12 = scalar_lea.sflag [#allocation3], 1
    %13 = vsyncpa %s12, 0
    loop: start=0, step=1, limit=4
    $region2: #{tpu_custom_call.1} parent=1 // loop_pre_header
      _
    $region3: #{tpu_custom_call.1} parent=1 // loop_header
      %s15 = sphi 0, %s19
      %p16 = scmp.ge.s32.totalorder %s15, 4
      %s25 = sphi 0, %s27
      %s28 = sphi 0, %s25
      %s29 = sphi 0, %s28
      %s45 = sphi 0, %s29
      %s49 = sphi 0, %s49
      %s51 = sphi 0, %s49
      %s52 = sphi 0, %s51
      %s66 = sphi 0, %s52
      %s70 = sphi 0, %s70
      %s72 = sphi 0, %s70
      %s73 = sphi 0, %s72
      %s87 = sphi 0, %s73
      %s91 = sphi 0, %s91
      %s93 = sphi 0, %s91
      %s94 = sphi 0, %s93
      %s108 = sphi 0, %s94
      %s112 = sphi 0, %s112
      %s114 = sphi 0, %s112
      %s115 = sphi 0, %s114
      %s129 = sphi 0, %s115
      %s133 = sphi 0, %s133
      %s135 = sphi 0, %s133
      %s136 = sphi 0, %s135
      %s150 = sphi 0, %s136
      %s156 = sphi 0, %s158
      %s159 = sphi 0, %s156
      %s160 = sphi 0, %s159
      %s176 = sphi 0, %s160
    $region4: #{tpu_custom_call.1} parent=1 // loop_header_branch
      %18 = sbr.rel (%p16) target = $region8
    $region5: #{tpu_custom_call.1} parent=1 // loop_body
      %s20 = ssub.s32 %s15, 1
      %s21 = ssub.s32 %s15, 2
      %s22 = sadd.s32 %s15, 1
      %s23 = ssub.s32 %s15, %s22
      %p24 = scmp.eq.s32.totalorder %s23, 0
      %s26 = sadd.s32 %s25, 1
      %s27 = scalar_select %p24, %s25, %s26
      %p30 = pneg %p24
      %p31 = scmp.eq.s32.totalorder %s15, 1
      %p32 = por %p30, %p31
      %p33 = scmp.ne.s32.totalorder %s25, %s28
      %p34 = scmp.eq.s32.totalorder %s15, 0
      %p35 = por %p33, %p34
      %p36 = scmp.ne.s32.totalorder %s25, %s28
      %p37 = scmp.eq.s32.totalorder %s20, 1
      %p38 = por %p36, %p37
      %p39 = scmp.ne.s32.totalorder %s28, %s29
      %p40 = scmp.eq.s32.totalorder %s20, 0
      %p41 = por %p39, %p40
      %p42 = scmp.ne.s32.totalorder %s28, %s29
      %p43 = scmp.eq.s32.totalorder %s21, 1
      %p44 = por %p42, %p43
      %p46 = scmp.ne.s32.totalorder %s29, %s45
      %p47 = scmp.eq.s32.totalorder %s21, 0
      %p48 = por %p46, %p47
      %s50 = sadd.s32 %s49, 1
      %p53 = scmp.eq.s32.totalorder %s15, 1
      %p54 = scmp.ne.s32.totalorder %s49, %s51
      %p55 = scmp.eq.s32.totalorder %s15, 0
      %p56 = por %p54, %p55
      %p57 = scmp.ne.s32.totalorder %s49, %s51
      %p58 = scmp.eq.s32.totalorder %s20, 1
      %p59 = por %p57, %p58
      %p60 = scmp.ne.s32.totalorder %s51, %s52
      %p61 = scmp.eq.s32.totalorder %s20, 0
      %p62 = por %p60, %p61
      %p63 = scmp.ne.s32.totalorder %s51, %s52
      %p64 = scmp.eq.s32.totalorder %s21, 1
      %p65 = por %p63, %p64
      %p67 = scmp.ne.s32.totalorder %s52, %s66
      %p68 = scmp.eq.s32.totalorder %s21, 0
      %p69 = por %p67, %p68
      %s71 = sadd.s32 %s70, 1
      %p74 = scmp.eq.s32.totalorder %s15, 1
      %p75 = scmp.ne.s32.totalorder %s70, %s72
      %p76 = scmp.eq.s32.totalorder %s15, 0
      %p77 = por %p75, %p76
      %p78 = scmp.ne.s32.totalorder %s70, %s72
      %p79 = scmp.eq.s32.totalorder %s20, 1
      %p80 = por %p78, %p79
      %p81 = scmp.ne.s32.totalorder %s72, %s73
      %p82 = scmp.eq.s32.totalorder %s20, 0
      %p83 = por %p81, %p82
      %p84 = scmp.ne.s32.totalorder %s72, %s73
      %p85 = scmp.eq.s32.totalorder %s21, 1
      %p86 = por %p84, %p85
      %p88 = scmp.ne.s32.totalorder %s73, %s87
      %p89 = scmp.eq.s32.totalorder %s21, 0
      %p90 = por %p88, %p89
      %s92 = sadd.s32 %s91, 1
      %p95 = scmp.eq.s32.totalorder %s15, 1
      %p96 = scmp.ne.s32.totalorder %s91, %s93
      %p97 = scmp.eq.s32.totalorder %s15, 0
      %p98 = por %p96, %p97
      %p99 = scmp.ne.s32.totalorder %s91, %s93
      %p100 = scmp.eq.s32.totalorder %s20, 1
      %p101 = por %p99, %p100
      %p102 = scmp.ne.s32.totalorder %s93, %s94
      %p103 = scmp.eq.s32.totalorder %s20, 0
      %p104 = por %p102, %p103
      %p105 = scmp.ne.s32.totalorder %s93, %s94
      %p106 = scmp.eq.s32.totalorder %s21, 1
      %p107 = por %p105, %p106
      %p109 = scmp.ne.s32.totalorder %s94, %s108
      %p110 = scmp.eq.s32.totalorder %s21, 0
      %p111 = por %p109, %p110
      %s113 = sadd.s32 %s112, 1
      %p116 = scmp.eq.s32.totalorder %s15, 1
      %p117 = scmp.ne.s32.totalorder %s112, %s114
      %p118 = scmp.eq.s32.totalorder %s15, 0
      %p119 = por %p117, %p118
      %p120 = scmp.ne.s32.totalorder %s112, %s114
      %p121 = scmp.eq.s32.totalorder %s20, 1
      %p122 = por %p120, %p121
      %p123 = scmp.ne.s32.totalorder %s114, %s115
      %p124 = scmp.eq.s32.totalorder %s20, 0
      %p125 = por %p123, %p124
      %p126 = scmp.ne.s32.totalorder %s114, %s115
      %p127 = scmp.eq.s32.totalorder %s21, 1
      %p128 = por %p126, %p127
      %p130 = scmp.ne.s32.totalorder %s115, %s129
      %p131 = scmp.eq.s32.totalorder %s21, 0
      %p132 = por %p130, %p131
      %s134 = sadd.s32 %s133, 1
      %p137 = scmp.eq.s32.totalorder %s15, 1
      %p138 = scmp.ne.s32.totalorder %s133, %s135
      %p139 = scmp.eq.s32.totalorder %s15, 0
      %p140 = por %p138, %p139
      %p141 = scmp.ne.s32.totalorder %s133, %s135
      %p142 = scmp.eq.s32.totalorder %s20, 1
      %p143 = por %p141, %p142
      %p144 = scmp.ne.s32.totalorder %s135, %s136
      %p145 = scmp.eq.s32.totalorder %s20, 0
      %p146 = por %p144, %p145
      %p147 = scmp.ne.s32.totalorder %s135, %s136
      %p148 = scmp.eq.s32.totalorder %s21, 1
      %p149 = por %p147, %p148
      %p151 = scmp.ne.s32.totalorder %s136, %s150
      %p152 = scmp.eq.s32.totalorder %s21, 0
      %p153 = por %p151, %p152
      %s154 = ssub.s32 %s15, %s22
      %p155 = scmp.eq.s32.totalorder %s154, 0
      %s157 = sadd.s32 %s156, 1
      %s158 = scalar_select %p155, %s156, %s157
      %p161 = pneg %p155
      %p162 = scmp.eq.s32.totalorder %s15, 1
      %p163 = por %p161, %p162
      %p164 = scmp.ne.s32.totalorder %s156, %s159
      %p165 = scmp.eq.s32.totalorder %s15, 0
      %p166 = por %p164, %p165
      %p167 = scmp.ne.s32.totalorder %s156, %s159
      %p168 = scmp.eq.s32.totalorder %s20, 1
      %p169 = por %p167, %p168
      %p170 = scmp.ne.s32.totalorder %s159, %s160
      %p171 = scmp.eq.s32.totalorder %s20, 0
      %p172 = por %p170, %p171
      %p173 = scmp.ne.s32.totalorder %s159, %s160
      %p174 = scmp.eq.s32.totalorder %s21, 1
      %p175 = por %p173, %p174
      %p177 = scmp.ne.s32.totalorder %s160, %s176
      %p178 = scmp.eq.s32.totalorder %s21, 0
      %p179 = por %p177, %p178
      %p180 = scmp.le.s32.totalorder 1, %s15
      %p181 = scmp.lt.s32.totalorder %s15, 3
      %p182 = pnand %p180, %p181
      %p183 = pneg %p182
      // Predicated region
      $region9: #{tpu_custom_call.1} parent=5 // pred_check
        _
      $region10: #{tpu_custom_call.1} parent=5 // pred_check_branch
        %185 = sbr.rel (%p182) target = $region12
      $region11: #{tpu_custom_call.1} parent=5 // pred_region
        %s186 = ssub.s32 %s15, 1
        // Predicated region
        $region13: #{tpu_custom_call.1} parent=11 // pred_check
          %p187 = pneg %p62
        $region14: #{tpu_custom_call.1} parent=11 // pred_check_branch
          %189 = sbr.rel (%p187) target = $region16
        $region15: #{tpu_custom_call.1} parent=11 // pred_region
          _
        $region16: #{tpu_custom_call.1} parent=11 // pred_fallthru
          _
        // Predicated region
        $region17: #{tpu_custom_call.1} parent=11 // pred_check
          %p190 = pneg %p83
        $region18: #{tpu_custom_call.1} parent=11 // pred_check_branch
          %192 = sbr.rel (%p190) target = $region20
        $region19: #{tpu_custom_call.1} parent=11 // pred_region
          _
        $region20: #{tpu_custom_call.1} parent=11 // pred_fallthru
          _
        // Predicated region
        $region21: #{tpu_custom_call.1} parent=11 // pred_check
          %p193 = pneg %p104
        $region22: #{tpu_custom_call.1} parent=11 // pred_check_branch
          %195 = sbr.rel (%p193) target = $region24
        $region23: #{tpu_custom_call.1} parent=11 // pred_region
          _
        $region24: #{tpu_custom_call.1} parent=11 // pred_fallthru
          _
        // Predicated region
        $region25: #{tpu_custom_call.1} parent=11 // pred_check
          %p196 = pneg %p125
        $region26: #{tpu_custom_call.1} parent=11 // pred_check_branch
          %198 = sbr.rel (%p196) target = $region28
        $region27: #{tpu_custom_call.1} parent=11 // pred_region
          _
        $region28: #{tpu_custom_call.1} parent=11 // pred_fallthru
          _
        // Predicated region
        $region29: #{tpu_custom_call.1} parent=11 // pred_check
          %p199 = pneg %p146
        $region30: #{tpu_custom_call.1} parent=11 // pred_check_branch
          %201 = sbr.rel (%p199) target = $region32
        $region31: #{tpu_custom_call.1} parent=11 // pred_region
          _
        $region32: #{tpu_custom_call.1} parent=11 // pred_fallthru
          _
      $region12: #{tpu_custom_call.1} parent=5 // pred_fallthru
        _
      %p202 = scmp.lt.s32.totalorder %s15, 2
      // Predicated region
      $region33: #{tpu_custom_call.1} parent=5 // pred_check
        %p203 = pneg %p202
      $region34: #{tpu_custom_call.1} parent=5 // pred_check_branch
        %205 = sbr.rel (%p203) target = $region36
      $region35: #{tpu_custom_call.1} parent=5 // pred_region
        // Predicated region
        $region37: #{tpu_custom_call.1} parent=35 // pred_check
          %p206 = pneg %p35
        $region38: #{tpu_custom_call.1} parent=35 // pred_check_branch
          %208 = sbr.rel (%p206) target = $region40
        $region39: #{tpu_custom_call.1} parent=35 // pred_region
          %s209 = smul.u32 2, %s15
          %p210 = scmp.lt.s32.totalorder %s209, 3
          %s211 = scalar_select %p210, %s209, 3
          %s212 = smul.addr %s211, 8
          %s213 = scalar_lea.vmem %s0, %s212
          %s214 = smul.u32 2, %s15
        $region40: #{tpu_custom_call.1} parent=35 // pred_fallthru
          _
      $region36: #{tpu_custom_call.1} parent=5 // pred_fallthru
        _
      %p215 = scmp.le.s32.totalorder 1, %s15
      %p216 = scmp.lt.s32.totalorder %s15, 3
      %p217 = pnand %p215, %p216
      %p218 = pneg %p217
      // Predicated region
      $region41: #{tpu_custom_call.1} parent=5 // pred_check
        _
      $region42: #{tpu_custom_call.1} parent=5 // pred_check_branch
        %220 = sbr.rel (%p217) target = $region44
      $region43: #{tpu_custom_call.1} parent=5 // pred_region
        %s221 = ssub.s32 %s15, 1
        %s222 = smul.u32 2, %s20
        %p223 = scmp.lt.s32.totalorder %s222, 3
        %s224 = scalar_select %p223, %s222, 3
        %s225 = smul.addr %s224, 8
        %s226 = scalar_lea.vmem %s0, %s225
        %p227 = pneg %p41
        %p228 = pneg %p38
        %p229 = pneg %p62
        %p230 = pneg %p59
        %p231 = pneg %p83
        %p232 = pneg %p80
        %p233 = pneg %p104
        %p234 = pneg %p101
        %p235 = pneg %p125
        %p236 = pneg %p122
        %p237 = pneg %p146
        %p238 = pneg %p143
        %p239 = pneg %p172
        %p240 = pneg %p169
        %s241 = sand.u32 %s159, 1
        %s242 = scalar_lea.sflag [#allocation3], %s241
        %s243 = sand.u32 %s159, 1
        %s244 = smul.addr %s243, 16
        %s245 = scalar_lea.vmem [#allocation2], %s244
        %s246 = smul.u32 2, %s20
        %p247 = scmp.lt.s32.totalorder %s246, 3
        %s248 = scalar_select %p247, %s246, 3
        %s249 = smul.addr %s248, 8
        %s250 = scalar_lea.vmem %s0, %s249
        %s251 = smul.u32 2, %s20
        %s252 = smul.u32 2, %s20
        %v253 = vld [vmem:[%s250] sm:$0xff]
        %v254 = vld [vmem:[%s250 + $0x8] sm:$0xff]
        %v255 = vld [vmem:[%s1] sm:$0xff]
        %v256 = vld [vmem:[%s1 + $0x8] sm:$0xff]
        %v257 = vld [vmem:[%s1 + $0x10] sm:$0xff]
        %v258 = vld [vmem:[%s1 + $0x18] sm:$0xff]
        %v259 = vld [vmem:[%s1 + $0x20] sm:$0xff]
        %v260 = vld [vmem:[%s1 + $0x28] sm:$0xff]
        %v261 = vld [vmem:[%s1 + $0x30] sm:$0xff]
        %v262 = vld [vmem:[%s1 + $0x38] sm:$0xff]
        %v263 = vld [vmem:[%s1 + $0x40] sm:$0xff]
        %v264 = vld [vmem:[%s1 + $0x48] sm:$0xff]
        %v265 = vld [vmem:[%s1 + $0x50] sm:$0xff]
        %v266 = vld [vmem:[%s1 + $0x58] sm:$0xff]
        %v267 = vld [vmem:[%s1 + $0x60] sm:$0xff]
        %v268 = vld [vmem:[%s1 + $0x68] sm:$0xff]
        %v269 = vld [vmem:[%s1 + $0x70] sm:$0xff]
        %v270 = vld [vmem:[%s1 + $0x78] sm:$0xff]
        %vm271 = vcmask 261120
        %v273 = vsel %vm271, %v253, 0
        %v276 = vsel %vm271, %v254, 0
        %278 = vmatprep.subr.mxu0 0.0
        %279 = vmatpush1.msra.mxu0 0.0
        %280 = vmatprep.subr.mxu0 0.0
        %281 = vmatpush1.msra.mxu0 0.0
        %282 = vmatprep.subr.mxu0 0.0
        %283 = vmatpush1.msra.mxu0 0.0
        %284 = vmatprep.subr.mxu0 0.0
        %285 = vmatpush1.msra.mxu0 0.0
        %286 = vmatprep.subr.mxu0 0.0
        %287 = vmatpush1.msra.mxu0 0.0
        %288 = vmatprep.subr.mxu0 0.0
        %289 = vmatpush1.msra.mxu0 0.0
        %290 = vmatprep.subr.mxu0 0.0
        %291 = vmatpush1.msra.mxu0 0.0
        %292 = vmatprep.subr.mxu0 0.0
        %293 = vmatpush1.msra.mxu0 0.0
        %294 = vmatprep.subr.mxu0 0.0
        %295 = vmatpush1.msra.mxu0 0.0
        %296 = vmatprep.subr.mxu0 0.0
        %297 = vmatpush1.msra.mxu0 0.0
        %298 = vmatprep.subr.mxu0 0.0
        %299 = vmatpush1.msra.mxu0 0.0
        %300 = vmatprep.subr.mxu0 0.0
        %301 = vmatpush1.msra.mxu0 0.0
        %302 = vmatprep.subr.mxu0 0.0
        %303 = vmatpush1.msra.mxu0 %v258
        %304 = vmatprep.subr.mxu0 0.0
        %305 = vmatpush1.msra.mxu0 %v257
        %306 = vmatprep.subr.mxu0 0.0
        %307 = vmatpush1.msra.mxu0 %v256
        %308 = vmatprep.subr.mxu0 0.0
        %309 = vmatpush1.msra.mxu0 %v255
        %310 = vmatprep.subr.mxu0 0.0
        %311 = vmatpush2.msra.mxu0 0.0
        %312 = vmatprep.subr.mxu0 0.0
        %313 = vmatpush2.msra.mxu0 0.0
        %314 = vmatprep.subr.mxu0 0.0
        %315 = vmatpush2.msra.mxu0 0.0
        %316 = vmatprep.subr.mxu0 0.0
        %317 = vmatpush2.msra.mxu0 0.0
        %318 = vmatprep.subr.mxu0 0.0
        %319 = vmatpush2.msra.mxu0 0.0
        %320 = vmatprep.subr.mxu0 0.0
        %321 = vmatpush2.msra.mxu0 0.0
        %322 = vmatprep.subr.mxu0 0.0
        %323 = vmatpush2.msra.mxu0 0.0
        %324 = vmatprep.subr.mxu0 0.0
        %325 = vmatpush2.msra.mxu0 0.0
        %326 = vmatprep.subr.mxu0 0.0
        %327 = vmatpush2.msra.mxu0 0.0
        %328 = vmatprep.subr.mxu0 0.0
        %329 = vmatpush2.msra.mxu0 0.0
        %330 = vmatprep.subr.mxu0 0.0
        %331 = vmatpush2.msra.mxu0 0.0
        %332 = vmatprep.subr.mxu0 0.0
        %333 = vmatpush2.msra.mxu0 0.0
        %334 = vmatprep.subr.mxu0 0.0
        %335 = vmatpush2.msra.mxu0 0.0
        %336 = vmatprep.subr.mxu0 0.0
        %337 = vmatpush2.msra.mxu0 0.0
        %338 = vmatprep.subr.mxu0 0.0
        %339 = vmatpush2.msra.mxu0 0.0
        %340 = vmatprep.subr.mxu0 0.0
        %341 = vmatpush2.msra.mxu0 0.0
        %342 = vmatprep.mubr.f32.mxu0 0.0
        %343 = vmatmul.mubr.f32.gmra.mxu0 %v273
        %v344 = vpop.f32.mrf.mxu0
        %v345 = vadd.f32 0.0, %v344
        %v346 = vpop.f32.mrf.mxu0
        %347 = vmatprep.mubr.f32.mxu0 0.0
        %348 = vmatmul.mubr.f32.gmra.mxu0 %v276
        %v349 = vpop.f32.mrf.mxu0
        %v350 = vadd.f32 0.0, %v349
        %v351 = vpop.f32.mrf.mxu0
        %352 = vdwg.mxu0
        %353 = vmatprep.subr.mxu0 0.0
        %354 = vmatpush1.msra.mxu0 0.0
        %355 = vmatprep.subr.mxu0 0.0
        %356 = vmatpush1.msra.mxu0 0.0
        %357 = vmatprep.subr.mxu0 0.0
        %358 = vmatpush1.msra.mxu0 0.0
        %359 = vmatprep.subr.mxu0 0.0
        %360 = vmatpush1.msra.mxu0 0.0
        %361 = vmatprep.subr.mxu0 0.0
        %362 = vmatpush1.msra.mxu0 0.0
        %363 = vmatprep.subr.mxu0 0.0
        %364 = vmatpush1.msra.mxu0 0.0
        %365 = vmatprep.subr.mxu0 0.0
        %366 = vmatpush1.msra.mxu0 0.0
        %367 = vmatprep.subr.mxu0 0.0
        %368 = vmatpush1.msra.mxu0 0.0
        %369 = vmatprep.subr.mxu0 0.0
        %370 = vmatpush1.msra.mxu0 0.0
        %371 = vmatprep.subr.mxu0 0.0
        %372 = vmatpush1.msra.mxu0 0.0
        %373 = vmatprep.subr.mxu0 0.0
        %374 = vmatpush1.msra.mxu0 0.0
        %375 = vmatprep.subr.mxu0 0.0
        %376 = vmatpush1.msra.mxu0 0.0
        %377 = vmatprep.subr.mxu0 0.0
        %378 = vmatpush1.msra.mxu0 %v262
        %379 = vmatprep.subr.mxu0 0.0
        %380 = vmatpush1.msra.mxu0 %v261
        %381 = vmatprep.subr.mxu0 0.0
        %382 = vmatpush1.msra.mxu0 %v260
        %383 = vmatprep.subr.mxu0 0.0
        %384 = vmatpush1.msra.mxu0 %v259
        %385 = vmatprep.subr.mxu0 0.0
        %386 = vmatpush2.msra.mxu0 0.0
        %387 = vmatprep.subr.mxu0 0.0
        %388 = vmatpush2.msra.mxu0 0.0
        %389 = vmatprep.subr.mxu0 0.0
        %390 = vmatpush2.msra.mxu0 0.0
        %391 = vmatprep.subr.mxu0 0.0
        %392 = vmatpush2.msra.mxu0 0.0
        %393 = vmatprep.subr.mxu0 0.0
        %394 = vmatpush2.msra.mxu0 0.0
        %395 = vmatprep.subr.mxu0 0.0
        %396 = vmatpush2.msra.mxu0 0.0
        %397 = vmatprep.subr.mxu0 0.0
        %398 = vmatpush2.msra.mxu0 0.0
        %399 = vmatprep.subr.mxu0 0.0
        %400 = vmatpush2.msra.mxu0 0.0
        %401 = vmatprep.subr.mxu0 0.0
        %402 = vmatpush2.msra.mxu0 0.0
        %403 = vmatprep.subr.mxu0 0.0
        %404 = vmatpush2.msra.mxu0 0.0
        %405 = vmatprep.subr.mxu0 0.0
        %406 = vmatpush2.msra.mxu0 0.0
        %407 = vmatprep.subr.mxu0 0.0
        %408 = vmatpush2.msra.mxu0 0.0
        %409 = vmatprep.subr.mxu0 0.0
        %410 = vmatpush2.msra.mxu0 0.0
        %411 = vmatprep.subr.mxu0 0.0
        %412 = vmatpush2.msra.mxu0 0.0
        %413 = vmatprep.subr.mxu0 0.0
        %414 = vmatpush2.msra.mxu0 0.0
        %415 = vmatprep.subr.mxu0 0.0
        %416 = vmatpush2.msra.mxu0 0.0
        %417 = vmatprep.mubr.f32.mxu0 0.0
        %418 = vmatmul.mubr.f32.gmra.mxu0 %v273
        %v419 = vpop.f32.mrf.mxu0
        %v420 = vadd.f32 0.0, %v419
        %v421 = vpop.f32.mrf.mxu0
        %422 = vmatprep.mubr.f32.mxu0 0.0
        %423 = vmatmul.mubr.f32.gmra.mxu0 %v276
        %v424 = vpop.f32.mrf.mxu0
        %v425 = vadd.f32 0.0, %v424
        %v426 = vpop.f32.mrf.mxu0
        %427 = vdwg.mxu0
        %428 = vmatprep.subr.mxu0 0.0
        %429 = vmatpush1.msra.mxu0 0.0
        %430 = vmatprep.subr.mxu0 0.0
        %431 = vmatpush1.msra.mxu0 0.0
        %432 = vmatprep.subr.mxu0 0.0
        %433 = vmatpush1.msra.mxu0 0.0
        %434 = vmatprep.subr.mxu0 0.0
        %435 = vmatpush1.msra.mxu0 0.0
        %436 = vmatprep.subr.mxu0 0.0
        %437 = vmatpush1.msra.mxu0 0.0
        %438 = vmatprep.subr.mxu0 0.0
        %439 = vmatpush1.msra.mxu0 0.0
        %440 = vmatprep.subr.mxu0 0.0
        %441 = vmatpush1.msra.mxu0 0.0
        %442 = vmatprep.subr.mxu0 0.0
        %443 = vmatpush1.msra.mxu0 0.0
        %444 = vmatprep.subr.mxu0 0.0
        %445 = vmatpush1.msra.mxu0 0.0
        %446 = vmatprep.subr.mxu0 0.0
        %447 = vmatpush1.msra.mxu0 0.0
        %448 = vmatprep.subr.mxu0 0.0
        %449 = vmatpush1.msra.mxu0 0.0
        %450 = vmatprep.subr.mxu0 0.0
        %451 = vmatpush1.msra.mxu0 0.0
        %452 = vmatprep.subr.mxu0 0.0
        %453 = vmatpush1.msra.mxu0 %v266
        %454 = vmatprep.subr.mxu0 0.0
        %455 = vmatpush1.msra.mxu0 %v265
        %456 = vmatprep.subr.mxu0 0.0
        %457 = vmatpush1.msra.mxu0 %v264
        %458 = vmatprep.subr.mxu0 0.0
        %459 = vmatpush1.msra.mxu0 %v263
        %460 = vmatprep.subr.mxu0 0.0
        %461 = vmatpush2.msra.mxu0 0.0
        %462 = vmatprep.subr.mxu0 0.0
        %463 = vmatpush2.msra.mxu0 0.0
        %464 = vmatprep.subr.mxu0 0.0
        %465 = vmatpush2.msra.mxu0 0.0
        %466 = vmatprep.subr.mxu0 0.0
        %467 = vmatpush2.msra.mxu0 0.0
        %468 = vmatprep.subr.mxu0 0.0
        %469 = vmatpush2.msra.mxu0 0.0
        %470 = vmatprep.subr.mxu0 0.0
        %471 = vmatpush2.msra.mxu0 0.0
        %472 = vmatprep.subr.mxu0 0.0
        %473 = vmatpush2.msra.mxu0 0.0
        %474 = vmatprep.subr.mxu0 0.0
        %475 = vmatpush2.msra.mxu0 0.0
        %476 = vmatprep.subr.mxu0 0.0
        %477 = vmatpush2.msra.mxu0 0.0
        %478 = vmatprep.subr.mxu0 0.0
        %479 = vmatpush2.msra.mxu0 0.0
        %480 = vmatprep.subr.mxu0 0.0
        %481 = vmatpush2.msra.mxu0 0.0
        %482 = vmatprep.subr.mxu0 0.0
        %483 = vmatpush2.msra.mxu0 0.0
        %484 = vmatprep.subr.mxu0 0.0
        %485 = vmatpush2.msra.mxu0 0.0
        %486 = vmatprep.subr.mxu0 0.0
        %487 = vmatpush2.msra.mxu0 0.0
        %488 = vmatprep.subr.mxu0 0.0
        %489 = vmatpush2.msra.mxu0 0.0
        %490 = vmatprep.subr.mxu0 0.0
        %491 = vmatpush2.msra.mxu0 0.0
        %492 = vmatprep.mubr.f32.mxu0 0.0
        %493 = vmatmul.mubr.f32.gmra.mxu0 %v273
        %v494 = vpop.f32.mrf.mxu0
        %v495 = vadd.f32 0.0, %v494
        %v496 = vpop.f32.mrf.mxu0
        %497 = vmatprep.mubr.f32.mxu0 0.0
        %498 = vmatmul.mubr.f32.gmra.mxu0 %v276
        %v499 = vpop.f32.mrf.mxu0
        %v500 = vadd.f32 0.0, %v499
        %v501 = vpop.f32.mrf.mxu0
        %502 = vdwg.mxu0
        %503 = vmatprep.subr.mxu0 0.0
        %504 = vmatpush1.msra.mxu0 0.0
        %505 = vmatprep.subr.mxu0 0.0
        %506 = vmatpush1.msra.mxu0 0.0
        %507 = vmatprep.subr.mxu0 0.0
        %508 = vmatpush1.msra.mxu0 0.0
        %509 = vmatprep.subr.mxu0 0.0
        %510 = vmatpush1.msra.mxu0 0.0
        %511 = vmatprep.subr.mxu0 0.0
        %512 = vmatpush1.msra.mxu0 0.0
        %513 = vmatprep.subr.mxu0 0.0
        %514 = vmatpush1.msra.mxu0 0.0
        %515 = vmatprep.subr.mxu0 0.0
        %516 = vmatpush1.msra.mxu0 0.0
        %517 = vmatprep.subr.mxu0 0.0
        %518 = vmatpush1.msra.mxu0 0.0
        %519 = vmatprep.subr.mxu0 0.0
        %520 = vmatpush1.msra.mxu0 0.0
        %521 = vmatprep.subr.mxu0 0.0
        %522 = vmatpush1.msra.mxu0 0.0
        %523 = vmatprep.subr.mxu0 0.0
        %524 = vmatpush1.msra.mxu0 0.0
        %525 = vmatprep.subr.mxu0 0.0
        %526 = vmatpush1.msra.mxu0 0.0
        %527 = vmatprep.subr.mxu0 0.0
        %528 = vmatpush1.msra.mxu0 %v270
        %529 = vmatprep.subr.mxu0 0.0
        %530 = vmatpush1.msra.mxu0 %v269
        %531 = vmatprep.subr.mxu0 0.0
        %532 = vmatpush1.msra.mxu0 %v268
        %533 = vmatprep.subr.mxu0 0.0
        %534 = vmatpush1.msra.mxu0 %v267
        %535 = vmatprep.subr.mxu0 0.0
        %536 = vmatpush2.msra.mxu0 0.0
        %537 = vmatprep.subr.mxu0 0.0
        %538 = vmatpush2.msra.mxu0 0.0
        %539 = vmatprep.subr.mxu0 0.0
        %540 = vmatpush2.msra.mxu0 0.0
        %541 = vmatprep.subr.mxu0 0.0
        %542 = vmatpush2.msra.mxu0 0.0
        %543 = vmatprep.subr.mxu0 0.0
        %544 = vmatpush2.msra.mxu0 0.0
        %545 = vmatprep.subr.mxu0 0.0
        %546 = vmatpush2.msra.mxu0 0.0
        %547 = vmatprep.subr.mxu0 0.0
        %548 = vmatpush2.msra.mxu0 0.0
        %549 = vmatprep.subr.mxu0 0.0
        %550 = vmatpush2.msra.mxu0 0.0
        %551 = vmatprep.subr.mxu0 0.0
        %552 = vmatpush2.msra.mxu0 0.0
        %553 = vmatprep.subr.mxu0 0.0
        %554 = vmatpush2.msra.mxu0 0.0
        %555 = vmatprep.subr.mxu0 0.0
        %556 = vmatpush2.msra.mxu0 0.0
        %557 = vmatprep.subr.mxu0 0.0
        %558 = vmatpush2.msra.mxu0 0.0
        %559 = vmatprep.subr.mxu0 0.0
        %560 = vmatpush2.msra.mxu0 0.0
        %561 = vmatprep.subr.mxu0 0.0
        %562 = vmatpush2.msra.mxu0 0.0
        %563 = vmatprep.subr.mxu0 0.0
        %564 = vmatpush2.msra.mxu0 0.0
        %565 = vmatprep.subr.mxu0 0.0
        %566 = vmatpush2.msra.mxu0 0.0
        %567 = vmatprep.mubr.f32.mxu0 0.0
        %568 = vmatmul.mubr.f32.gmra.mxu0 %v273
        %v569 = vpop.f32.mrf.mxu0
        %v570 = vadd.f32 0.0, %v569
        %v571 = vpop.f32.mrf.mxu0
        %572 = vmatprep.mubr.f32.mxu0 0.0
        %573 = vmatmul.mubr.f32.gmra.mxu0 %v276
        %v574 = vpop.f32.mrf.mxu0
        %v575 = vadd.f32 0.0, %v574
        %v576 = vpop.f32.mrf.mxu0
        %577 = vdwg.mxu0
        %v578 = vld [vmem:[%s2] sm:$0xff]
        %v579 = vld [vmem:[%s2 + $0x8] sm:$0xff]
        %v580 = vld [vmem:[%s2 + $0x10] sm:$0xff]
        %v581 = vld [vmem:[%s2 + $0x18] sm:$0xff]
        %v582 = vld [vmem:[%s2 + $0x20] sm:$0xff]
        %v583 = vld [vmem:[%s2 + $0x28] sm:$0xff]
        %v584 = vld [vmem:[%s2 + $0x30] sm:$0xff]
        %v585 = vld [vmem:[%s2 + $0x38] sm:$0xff]
        %v586 = vld [vmem:[%s2 + $0x40] sm:$0xff]
        %v587 = vld [vmem:[%s2 + $0x48] sm:$0xff]
        %v588 = vld [vmem:[%s2 + $0x50] sm:$0xff]
        %v589 = vld [vmem:[%s2 + $0x58] sm:$0xff]
        %v590 = vld [vmem:[%s2 + $0x60] sm:$0xff]
        %v591 = vld [vmem:[%s2 + $0x68] sm:$0xff]
        %v592 = vld [vmem:[%s2 + $0x70] sm:$0xff]
        %v593 = vld [vmem:[%s2 + $0x78] sm:$0xff]
        %594 = vmatprep.subr.mxu0 0.0
        %595 = vmatpush1.msra.mxu0 0.0
        %596 = vmatprep.subr.mxu0 0.0
        %597 = vmatpush1.msra.mxu0 0.0
        %598 = vmatprep.subr.mxu0 0.0
        %599 = vmatpush1.msra.mxu0 0.0
        %600 = vmatprep.subr.mxu0 0.0
        %601 = vmatpush1.msra.mxu0 0.0
        %602 = vmatprep.subr.mxu0 0.0
        %603 = vmatpush1.msra.mxu0 0.0
        %604 = vmatprep.subr.mxu0 0.0
        %605 = vmatpush1.msra.mxu0 0.0
        %606 = vmatprep.subr.mxu0 0.0
        %607 = vmatpush1.msra.mxu0 0.0
        %608 = vmatprep.subr.mxu0 0.0
        %609 = vmatpush1.msra.mxu0 0.0
        %610 = vmatprep.subr.mxu0 0.0
        %611 = vmatpush1.msra.mxu0 0.0
        %612 = vmatprep.subr.mxu0 0.0
        %613 = vmatpush1.msra.mxu0 0.0
        %614 = vmatprep.subr.mxu0 0.0
        %615 = vmatpush1.msra.mxu0 0.0
        %616 = vmatprep.subr.mxu0 0.0
        %617 = vmatpush1.msra.mxu0 0.0
        %618 = vmatprep.subr.mxu0 0.0
        %619 = vmatpush1.msra.mxu0 %v581
        %620 = vmatprep.subr.mxu0 0.0
        %621 = vmatpush1.msra.mxu0 %v580
        %622 = vmatprep.subr.mxu0 0.0
        %623 = vmatpush1.msra.mxu0 %v579
        %624 = vmatprep.subr.mxu0 0.0
        %625 = vmatpush1.msra.mxu0 %v578
        %626 = vmatprep.subr.mxu0 0.0
        %627 = vmatpush2.msra.mxu0 0.0
        %628 = vmatprep.subr.mxu0 0.0
        %629 = vmatpush2.msra.mxu0 0.0
        %630 = vmatprep.subr.mxu0 0.0
        %631 = vmatpush2.msra.mxu0 0.0
        %632 = vmatprep.subr.mxu0 0.0
        %633 = vmatpush2.msra.mxu0 0.0
        %634 = vmatprep.subr.mxu0 0.0
        %635 = vmatpush2.msra.mxu0 0.0
        %636 = vmatprep.subr.mxu0 0.0
        %637 = vmatpush2.msra.mxu0 0.0
        %638 = vmatprep.subr.mxu0 0.0
        %639 = vmatpush2.msra.mxu0 0.0
        %640 = vmatprep.subr.mxu0 0.0
        %641 = vmatpush2.msra.mxu0 0.0
        %642 = vmatprep.subr.mxu0 0.0
        %643 = vmatpush2.msra.mxu0 0.0
        %644 = vmatprep.subr.mxu0 0.0
        %645 = vmatpush2.msra.mxu0 0.0
        %646 = vmatprep.subr.mxu0 0.0
        %647 = vmatpush2.msra.mxu0 0.0
        %648 = vmatprep.subr.mxu0 0.0
        %649 = vmatpush2.msra.mxu0 0.0
        %650 = vmatprep.subr.mxu0 0.0
        %651 = vmatpush2.msra.mxu0 0.0
        %652 = vmatprep.subr.mxu0 0.0
        %653 = vmatpush2.msra.mxu0 0.0
        %654 = vmatprep.subr.mxu0 0.0
        %655 = vmatpush2.msra.mxu0 0.0
        %656 = vmatprep.subr.mxu0 0.0
        %657 = vmatpush2.msra.mxu0 0.0
        %658 = vmatprep.mubr.f32.mxu0 0.0
        %659 = vmatmul.mubr.f32.gmra.mxu0 %v273
        %v660 = vpop.f32.mrf.mxu0
        %v661 = vadd.f32 0.0, %v660
        %v662 = vpop.f32.mrf.mxu0
        %663 = vmatprep.mubr.f32.mxu0 0.0
        %664 = vmatmul.mubr.f32.gmra.mxu0 %v276
        %v665 = vpop.f32.mrf.mxu0
        %v666 = vadd.f32 0.0, %v665
        %v667 = vpop.f32.mrf.mxu0
        %668 = vdwg.mxu0
        %669 = vmatprep.subr.mxu0 0.0
        %670 = vmatpush1.msra.mxu0 0.0
        %671 = vmatprep.subr.mxu0 0.0
        %672 = vmatpush1.msra.mxu0 0.0
        %673 = vmatprep.subr.mxu0 0.0
        %674 = vmatpush1.msra.mxu0 0.0
        %675 = vmatprep.subr.mxu0 0.0
        %676 = vmatpush1.msra.mxu0 0.0
        %677 = vmatprep.subr.mxu0 0.0
        %678 = vmatpush1.msra.mxu0 0.0
        %679 = vmatprep.subr.mxu0 0.0
        %680 = vmatpush1.msra.mxu0 0.0
        %681 = vmatprep.subr.mxu0 0.0
        %682 = vmatpush1.msra.mxu0 0.0
        %683 = vmatprep.subr.mxu0 0.0
        %684 = vmatpush1.msra.mxu0 0.0
        %685 = vmatprep.subr.mxu0 0.0
        %686 = vmatpush1.msra.mxu0 0.0
        %687 = vmatprep.subr.mxu0 0.0
        %688 = vmatpush1.msra.mxu0 0.0
        %689 = vmatprep.subr.mxu0 0.0
        %690 = vmatpush1.msra.mxu0 0.0
        %691 = vmatprep.subr.mxu0 0.0
        %692 = vmatpush1.msra.mxu0 0.0
        %693 = vmatprep.subr.mxu0 0.0
        %694 = vmatpush1.msra.mxu0 %v585
        %695 = vmatprep.subr.mxu0 0.0
        %696 = vmatpush1.msra.mxu0 %v584
        %697 = vmatprep.subr.mxu0 0.0
        %698 = vmatpush1.msra.mxu0 %v583
        %699 = vmatprep.subr.mxu0 0.0
        %700 = vmatpush1.msra.mxu0 %v582
        %701 = vmatprep.subr.mxu0 0.0
        %702 = vmatpush2.msra.mxu0 0.0
        %703 = vmatprep.subr.mxu0 0.0
        %704 = vmatpush2.msra.mxu0 0.0
        %705 = vmatprep.subr.mxu0 0.0
        %706 = vmatpush2.msra.mxu0 0.0
        %707 = vmatprep.subr.mxu0 0.0
        %708 = vmatpush2.msra.mxu0 0.0
        %709 = vmatprep.subr.mxu0 0.0
        %710 = vmatpush2.msra.mxu0 0.0
        %711 = vmatprep.subr.mxu0 0.0
        %712 = vmatpush2.msra.mxu0 0.0
        %713 = vmatprep.subr.mxu0 0.0
        %714 = vmatpush2.msra.mxu0 0.0
        %715 = vmatprep.subr.mxu0 0.0
        %716 = vmatpush2.msra.mxu0 0.0
        %717 = vmatprep.subr.mxu0 0.0
        %718 = vmatpush2.msra.mxu0 0.0
        %719 = vmatprep.subr.mxu0 0.0
        %720 = vmatpush2.msra.mxu0 0.0
        %721 = vmatprep.subr.mxu0 0.0
        %722 = vmatpush2.msra.mxu0 0.0
        %723 = vmatprep.subr.mxu0 0.0
        %724 = vmatpush2.msra.mxu0 0.0
        %725 = vmatprep.subr.mxu0 0.0
        %726 = vmatpush2.msra.mxu0 0.0
        %727 = vmatprep.subr.mxu0 0.0
        %728 = vmatpush2.msra.mxu0 0.0
        %729 = vmatprep.subr.mxu0 0.0
        %730 = vmatpush2.msra.mxu0 0.0
        %731 = vmatprep.subr.mxu0 0.0
        %732 = vmatpush2.msra.mxu0 0.0
        %733 = vmatprep.mubr.f32.mxu0 0.0
        %734 = vmatmul.mubr.f32.gmra.mxu0 %v273
        %v735 = vpop.f32.mrf.mxu0
        %v736 = vadd.f32 0.0, %v735
        %v737 = vpop.f32.mrf.mxu0
        %738 = vmatprep.mubr.f32.mxu0 0.0
        %739 = vmatmul.mubr.f32.gmra.mxu0 %v276
        %v740 = vpop.f32.mrf.mxu0
        %v741 = vadd.f32 0.0, %v740
        %v742 = vpop.f32.mrf.mxu0
        %743 = vdwg.mxu0
        %744 = vmatprep.subr.mxu0 0.0
        %745 = vmatpush1.msra.mxu0 0.0
        %746 = vmatprep.subr.mxu0 0.0
        %747 = vmatpush1.msra.mxu0 0.0
        %748 = vmatprep.subr.mxu0 0.0
        %749 = vmatpush1.msra.mxu0 0.0
        %750 = vmatprep.subr.mxu0 0.0
        %751 = vmatpush1.msra.mxu0 0.0
        %752 = vmatprep.subr.mxu0 0.0
        %753 = vmatpush1.msra.mxu0 0.0
        %754 = vmatprep.subr.mxu0 0.0
        %755 = vmatpush1.msra.mxu0 0.0
        %756 = vmatprep.subr.mxu0 0.0
        %757 = vmatpush1.msra.mxu0 0.0
        %758 = vmatprep.subr.mxu0 0.0
        %759 = vmatpush1.msra.mxu0 0.0
        %760 = vmatprep.subr.mxu0 0.0
        %761 = vmatpush1.msra.mxu0 0.0
        %762 = vmatprep.subr.mxu0 0.0
        %763 = vmatpush1.msra.mxu0 0.0
        %764 = vmatprep.subr.mxu0 0.0
        %765 = vmatpush1.msra.mxu0 0.0
        %766 = vmatprep.subr.mxu0 0.0
        %767 = vmatpush1.msra.mxu0 0.0
        %768 = vmatprep.subr.mxu0 0.0
        %769 = vmatpush1.msra.mxu0 %v589
        %770 = vmatprep.subr.mxu0 0.0
        %771 = vmatpush1.msra.mxu0 %v588
        %772 = vmatprep.subr.mxu0 0.0
        %773 = vmatpush1.msra.mxu0 %v587
        %774 = vmatprep.subr.mxu0 0.0
        %775 = vmatpush1.msra.mxu0 %v586
        %776 = vmatprep.subr.mxu0 0.0
        %777 = vmatpush2.msra.mxu0 0.0
        %778 = vmatprep.subr.mxu0 0.0
        %779 = vmatpush2.msra.mxu0 0.0
        %780 = vmatprep.subr.mxu0 0.0
        %781 = vmatpush2.msra.mxu0 0.0
        %782 = vmatprep.subr.mxu0 0.0
        %783 = vmatpush2.msra.mxu0 0.0
        %784 = vmatprep.subr.mxu0 0.0
        %785 = vmatpush2.msra.mxu0 0.0
        %786 = vmatprep.subr.mxu0 0.0
        %787 = vmatpush2.msra.mxu0 0.0
        %788 = vmatprep.subr.mxu0 0.0
        %789 = vmatpush2.msra.mxu0 0.0
        %790 = vmatprep.subr.mxu0 0.0
        %791 = vmatpush2.msra.mxu0 0.0
        %792 = vmatprep.subr.mxu0 0.0
        %793 = vmatpush2.msra.mxu0 0.0
        %794 = vmatprep.subr.mxu0 0.0
        %795 = vmatpush2.msra.mxu0 0.0
        %796 = vmatprep.subr.mxu0 0.0
        %797 = vmatpush2.msra.mxu0 0.0
        %798 = vmatprep.subr.mxu0 0.0
        %799 = vmatpush2.msra.mxu0 0.0
        %800 = vmatprep.subr.mxu0 0.0
        %801 = vmatpush2.msra.mxu0 0.0
        %802 = vmatprep.subr.mxu0 0.0
        %803 = vmatpush2.msra.mxu0 0.0
        %804 = vmatprep.subr.mxu0 0.0
        %805 = vmatpush2.msra.mxu0 0.0
        %806 = vmatprep.subr.mxu0 0.0
        %807 = vmatpush2.msra.mxu0 0.0
        %808 = vmatprep.mubr.f32.mxu0 0.0
        %809 = vmatmul.mubr.f32.gmra.mxu0 %v273
        %v810 = vpop.f32.mrf.mxu0
        %v811 = vadd.f32 0.0, %v810
        %v812 = vpop.f32.mrf.mxu0
        %813 = vmatprep.mubr.f32.mxu0 0.0
        %814 = vmatmul.mubr.f32.gmra.mxu0 %v276
        %v815 = vpop.f32.mrf.mxu0
        %v816 = vadd.f32 0.0, %v815
        %v817 = vpop.f32.mrf.mxu0
        %818 = vdwg.mxu0
        %819 = vmatprep.subr.mxu0 0.0
        %820 = vmatpush1.msra.mxu0 0.0
        %821 = vmatprep.subr.mxu0 0.0
        %822 = vmatpush1.msra.mxu0 0.0
        %823 = vmatprep.subr.mxu0 0.0
        %824 = vmatpush1.msra.mxu0 0.0
        %825 = vmatprep.subr.mxu0 0.0
        %826 = vmatpush1.msra.mxu0 0.0
        %827 = vmatprep.subr.mxu0 0.0
        %828 = vmatpush1.msra.mxu0 0.0
        %829 = vmatprep.subr.mxu0 0.0
        %830 = vmatpush1.msra.mxu0 0.0
        %831 = vmatprep.subr.mxu0 0.0
        %832 = vmatpush1.msra.mxu0 0.0
        %833 = vmatprep.subr.mxu0 0.0
        %834 = vmatpush1.msra.mxu0 0.0
        %835 = vmatprep.subr.mxu0 0.0
        %836 = vmatpush1.msra.mxu0 0.0
        %837 = vmatprep.subr.mxu0 0.0
        %838 = vmatpush1.msra.mxu0 0.0
        %839 = vmatprep.subr.mxu0 0.0
        %840 = vmatpush1.msra.mxu0 0.0
        %841 = vmatprep.subr.mxu0 0.0
        %842 = vmatpush1.msra.mxu0 0.0
        %843 = vmatprep.subr.mxu0 0.0
        %844 = vmatpush1.msra.mxu0 %v593
        %845 = vmatprep.subr.mxu0 0.0
        %846 = vmatpush1.msra.mxu0 %v592
        %847 = vmatprep.subr.mxu0 0.0
        %848 = vmatpush1.msra.mxu0 %v591
        %849 = vmatprep.subr.mxu0 0.0
        %850 = vmatpush1.msra.mxu0 %v590
        %851 = vmatprep.subr.mxu0 0.0
        %852 = vmatpush2.msra.mxu0 0.0
        %853 = vmatprep.subr.mxu0 0.0
        %854 = vmatpush2.msra.mxu0 0.0
        %855 = vmatprep.subr.mxu0 0.0
        %856 = vmatpush2.msra.mxu0 0.0
        %857 = vmatprep.subr.mxu0 0.0
        %858 = vmatpush2.msra.mxu0 0.0
        %859 = vmatprep.subr.mxu0 0.0
        %860 = vmatpush2.msra.mxu0 0.0
        %861 = vmatprep.subr.mxu0 0.0
        %862 = vmatpush2.msra.mxu0 0.0
        %863 = vmatprep.subr.mxu0 0.0
        %864 = vmatpush2.msra.mxu0 0.0
        %865 = vmatprep.subr.mxu0 0.0
        %866 = vmatpush2.msra.mxu0 0.0
        %867 = vmatprep.subr.mxu0 0.0
        %868 = vmatpush2.msra.mxu0 0.0
        %869 = vmatprep.subr.mxu0 0.0
        %870 = vmatpush2.msra.mxu0 0.0
        %871 = vmatprep.subr.mxu0 0.0
        %872 = vmatpush2.msra.mxu0 0.0
        %873 = vmatprep.subr.mxu0 0.0
        %874 = vmatpush2.msra.mxu0 0.0
        %875 = vmatprep.subr.mxu0 0.0
        %876 = vmatpush2.msra.mxu0 0.0
        %877 = vmatprep.subr.mxu0 0.0
        %878 = vmatpush2.msra.mxu0 0.0
        %879 = vmatprep.subr.mxu0 0.0
        %880 = vmatpush2.msra.mxu0 0.0
        %881 = vmatprep.subr.mxu0 0.0
        %882 = vmatpush2.msra.mxu0 0.0
        %883 = vmatprep.mubr.f32.mxu0 0.0
        %884 = vmatmul.mubr.f32.gmra.mxu0 %v273
        %v885 = vpop.f32.mrf.mxu0
        %v886 = vadd.f32 0.0, %v885
        %v887 = vpop.f32.mrf.mxu0
        %888 = vmatprep.mubr.f32.mxu0 0.0
        %889 = vmatmul.mubr.f32.gmra.mxu0 %v276
        %v890 = vpop.f32.mrf.mxu0
        %v891 = vadd.f32 0.0, %v890
        %v892 = vpop.f32.mrf.mxu0
        %893 = vdwg.mxu0
        %v894 = vld [vmem:[%s3] sm:$0xff]
        %v895 = vld [vmem:[%s3 + $0x8] sm:$0xff]
        %v896 = vld [vmem:[%s3 + $0x10] sm:$0xff]
        %v897 = vld [vmem:[%s3 + $0x18] sm:$0xff]
        %v898 = vld [vmem:[%s3 + $0x20] sm:$0xff]
        %v899 = vld [vmem:[%s3 + $0x28] sm:$0xff]
        %v900 = vld [vmem:[%s3 + $0x30] sm:$0xff]
        %v901 = vld [vmem:[%s3 + $0x38] sm:$0xff]
        %v902 = vld [vmem:[%s3 + $0x40] sm:$0xff]
        %v903 = vld [vmem:[%s3 + $0x48] sm:$0xff]
        %v904 = vld [vmem:[%s3 + $0x50] sm:$0xff]
        %v905 = vld [vmem:[%s3 + $0x58] sm:$0xff]
        %v906 = vld [vmem:[%s3 + $0x60] sm:$0xff]
        %v907 = vld [vmem:[%s3 + $0x68] sm:$0xff]
        %v908 = vld [vmem:[%s3 + $0x70] sm:$0xff]
        %v909 = vld [vmem:[%s3 + $0x78] sm:$0xff]
        %910 = vmatprep.subr.mxu0 0.0
        %911 = vmatpush1.msra.mxu0 0.0
        %912 = vmatprep.subr.mxu0 0.0
        %913 = vmatpush1.msra.mxu0 0.0
        %914 = vmatprep.subr.mxu0 0.0
        %915 = vmatpush1.msra.mxu0 0.0
        %916 = vmatprep.subr.mxu0 0.0
        %917 = vmatpush1.msra.mxu0 0.0
        %918 = vmatprep.subr.mxu0 0.0
        %919 = vmatpush1.msra.mxu0 0.0
        %920 = vmatprep.subr.mxu0 0.0
        %921 = vmatpush1.msra.mxu0 0.0
        %922 = vmatprep.subr.mxu0 0.0
        %923 = vmatpush1.msra.mxu0 0.0
        %924 = vmatprep.subr.mxu0 0.0
        %925 = vmatpush1.msra.mxu0 0.0
        %926 = vmatprep.subr.mxu0 0.0
        %927 = vmatpush1.msra.mxu0 0.0
        %928 = vmatprep.subr.mxu0 0.0
        %929 = vmatpush1.msra.mxu0 0.0
        %930 = vmatprep.subr.mxu0 0.0
        %931 = vmatpush1.msra.mxu0 0.0
        %932 = vmatprep.subr.mxu0 0.0
        %933 = vmatpush1.msra.mxu0 0.0
        %934 = vmatprep.subr.mxu0 0.0
        %935 = vmatpush1.msra.mxu0 %v897
        %936 = vmatprep.subr.mxu0 0.0
        %937 = vmatpush1.msra.mxu0 %v896
        %938 = vmatprep.subr.mxu0 0.0
        %939 = vmatpush1.msra.mxu0 %v895
        %940 = vmatprep.subr.mxu0 0.0
        %941 = vmatpush1.msra.mxu0 %v894
        %942 = vmatprep.subr.mxu0 0.0
        %943 = vmatpush2.msra.mxu0 0.0
        %944 = vmatprep.subr.mxu0 0.0
        %945 = vmatpush2.msra.mxu0 0.0
        %946 = vmatprep.subr.mxu0 0.0
        %947 = vmatpush2.msra.mxu0 0.0
        %948 = vmatprep.subr.mxu0 0.0
        %949 = vmatpush2.msra.mxu0 0.0
        %950 = vmatprep.subr.mxu0 0.0
        %951 = vmatpush2.msra.mxu0 0.0
        %952 = vmatprep.subr.mxu0 0.0
        %953 = vmatpush2.msra.mxu0 0.0
        %954 = vmatprep.subr.mxu0 0.0
        %955 = vmatpush2.msra.mxu0 0.0
        %956 = vmatprep.subr.mxu0 0.0
        %957 = vmatpush2.msra.mxu0 0.0
        %958 = vmatprep.subr.mxu0 0.0
        %959 = vmatpush2.msra.mxu0 0.0
        %960 = vmatprep.subr.mxu0 0.0
        %961 = vmatpush2.msra.mxu0 0.0
        %962 = vmatprep.subr.mxu0 0.0
        %963 = vmatpush2.msra.mxu0 0.0
        %964 = vmatprep.subr.mxu0 0.0
        %965 = vmatpush2.msra.mxu0 0.0
        %966 = vmatprep.subr.mxu0 0.0
        %967 = vmatpush2.msra.mxu0 0.0
        %968 = vmatprep.subr.mxu0 0.0
        %969 = vmatpush2.msra.mxu0 0.0
        %970 = vmatprep.subr.mxu0 0.0
        %971 = vmatpush2.msra.mxu0 0.0
        %972 = vmatprep.subr.mxu0 0.0
        %973 = vmatpush2.msra.mxu0 0.0
        %974 = vmatprep.mubr.f32.mxu0 0.0
        %975 = vmatmul.mubr.f32.gmra.mxu0 %v273
        %v976 = vpop.f32.mrf.mxu0
        %v977 = vadd.f32 0.0, %v976
        %v978 = vpop.f32.mrf.mxu0
        %979 = vmatprep.mubr.f32.mxu0 0.0
        %980 = vmatmul.mubr.f32.gmra.mxu0 %v276
        %v981 = vpop.f32.mrf.mxu0
        %v982 = vadd.f32 0.0, %v981
        %v983 = vpop.f32.mrf.mxu0
        %984 = vdwg.mxu0
        %985 = vmatprep.subr.mxu0 0.0
        %986 = vmatpush1.msra.mxu0 0.0
        %987 = vmatprep.subr.mxu0 0.0
        %988 = vmatpush1.msra.mxu0 0.0
        %989 = vmatprep.subr.mxu0 0.0
        %990 = vmatpush1.msra.mxu0 0.0
        %991 = vmatprep.subr.mxu0 0.0
        %992 = vmatpush1.msra.mxu0 0.0
        %993 = vmatprep.subr.mxu0 0.0
        %994 = vmatpush1.msra.mxu0 0.0
        %995 = vmatprep.subr.mxu0 0.0
        %996 = vmatpush1.msra.mxu0 0.0
        %997 = vmatprep.subr.mxu0 0.0
        %998 = vmatpush1.msra.mxu0 0.0
        %999 = vmatprep.subr.mxu0 0.0
        %1000 = vmatpush1.msra.mxu0 0.0
        %1001 = vmatprep.subr.mxu0 0.0
        %1002 = vmatpush1.msra.mxu0 0.0
        %1003 = vmatprep.subr.mxu0 0.0
        %1004 = vmatpush1.msra.mxu0 0.0
        %1005 = vmatprep.subr.mxu0 0.0
        %1006 = vmatpush1.msra.mxu0 0.0
        %1007 = vmatprep.subr.mxu0 0.0
        %1008 = vmatpush1.msra.mxu0 0.0
        %1009 = vmatprep.subr.mxu0 0.0
        %1010 = vmatpush1.msra.mxu0 %v901
        %1011 = vmatprep.subr.mxu0 0.0
        %1012 = vmatpush1.msra.mxu0 %v900
        %1013 = vmatprep.subr.mxu0 0.0
        %1014 = vmatpush1.msra.mxu0 %v899
        %1015 = vmatprep.subr.mxu0 0.0
        %1016 = vmatpush1.msra.mxu0 %v898
        %1017 = vmatprep.subr.mxu0 0.0
        %1018 = vmatpush2.msra.mxu0 0.0
        %1019 = vmatprep.subr.mxu0 0.0
        %1020 = vmatpush2.msra.mxu0 0.0
        %1021 = vmatprep.subr.mxu0 0.0
        %1022 = vmatpush2.msra.mxu0 0.0
        %1023 = vmatprep.subr.mxu0 0.0
        %1024 = vmatpush2.msra.mxu0 0.0
        %1025 = vmatprep.subr.mxu0 0.0
        %1026 = vmatpush2.msra.mxu0 0.0
        %1027 = vmatprep.subr.mxu0 0.0
        %1028 = vmatpush2.msra.mxu0 0.0
        %1029 = vmatprep.subr.mxu0 0.0
        %1030 = vmatpush2.msra.mxu0 0.0
        %1031 = vmatprep.subr.mxu0 0.0
        %1032 = vmatpush2.msra.mxu0 0.0
        %1033 = vmatprep.subr.mxu0 0.0
        %1034 = vmatpush2.msra.mxu0 0.0
        %1035 = vmatprep.subr.mxu0 0.0
        %1036 = vmatpush2.msra.mxu0 0.0
        %1037 = vmatprep.subr.mxu0 0.0
        %1038 = vmatpush2.msra.mxu0 0.0
        %1039 = vmatprep.subr.mxu0 0.0
        %1040 = vmatpush2.msra.mxu0 0.0
        %1041 = vmatprep.subr.mxu0 0.0
        %1042 = vmatpush2.msra.mxu0 0.0
        %1043 = vmatprep.subr.mxu0 0.0
        %1044 = vmatpush2.msra.mxu0 0.0
        %1045 = vmatprep.subr.mxu0 0.0
        %1046 = vmatpush2.msra.mxu0 0.0
        %1047 = vmatprep.subr.mxu0 0.0
        %1048 = vmatpush2.msra.mxu0 0.0
        %1049 = vmatprep.mubr.f32.mxu0 0.0
        %1050 = vmatmul.mubr.f32.gmra.mxu0 %v273
        %v1051 = vpop.f32.mrf.mxu0
        %v1052 = vadd.f32 0.0, %v1051
        %v1053 = vpop.f32.mrf.mxu0
        %1054 = vmatprep.mubr.f32.mxu0 0.0
        %1055 = vmatmul.mubr.f32.gmra.mxu0 %v276
        %v1056 = vpop.f32.mrf.mxu0
        %v1057 = vadd.f32 0.0, %v1056
        %v1058 = vpop.f32.mrf.mxu0
        %1059 = vdwg.mxu0
        %1060 = vmatprep.subr.mxu0 0.0
        %1061 = vmatpush1.msra.mxu0 0.0
        %1062 = vmatprep.subr.mxu0 0.0
        %1063 = vmatpush1.msra.mxu0 0.0
        %1064 = vmatprep.subr.mxu0 0.0
        %1065 = vmatpush1.msra.mxu0 0.0
        %1066 = vmatprep.subr.mxu0 0.0
        %1067 = vmatpush1.msra.mxu0 0.0
        %1068 = vmatprep.subr.mxu0 0.0
        %1069 = vmatpush1.msra.mxu0 0.0
        %1070 = vmatprep.subr.mxu0 0.0
        %1071 = vmatpush1.msra.mxu0 0.0
        %1072 = vmatprep.subr.mxu0 0.0
        %1073 = vmatpush1.msra.mxu0 0.0
        %1074 = vmatprep.subr.mxu0 0.0
        %1075 = vmatpush1.msra.mxu0 0.0
        %1076 = vmatprep.subr.mxu0 0.0
        %1077 = vmatpush1.msra.mxu0 0.0
        %1078 = vmatprep.subr.mxu0 0.0
        %1079 = vmatpush1.msra.mxu0 0.0
        %1080 = vmatprep.subr.mxu0 0.0
        %1081 = vmatpush1.msra.mxu0 0.0
        %1082 = vmatprep.subr.mxu0 0.0
        %1083 = vmatpush1.msra.mxu0 0.0
        %1084 = vmatprep.subr.mxu0 0.0
        %1085 = vmatpush1.msra.mxu0 %v905
        %1086 = vmatprep.subr.mxu0 0.0
        %1087 = vmatpush1.msra.mxu0 %v904
        %1088 = vmatprep.subr.mxu0 0.0
        %1089 = vmatpush1.msra.mxu0 %v903
        %1090 = vmatprep.subr.mxu0 0.0
        %1091 = vmatpush1.msra.mxu0 %v902
        %1092 = vmatprep.subr.mxu0 0.0
        %1093 = vmatpush2.msra.mxu0 0.0
        %1094 = vmatprep.subr.mxu0 0.0
        %1095 = vmatpush2.msra.mxu0 0.0
        %1096 = vmatprep.subr.mxu0 0.0
        %1097 = vmatpush2.msra.mxu0 0.0
        %1098 = vmatprep.subr.mxu0 0.0
        %1099 = vmatpush2.msra.mxu0 0.0
        %1100 = vmatprep.subr.mxu0 0.0
        %1101 = vmatpush2.msra.mxu0 0.0
        %1102 = vmatprep.subr.mxu0 0.0
        %1103 = vmatpush2.msra.mxu0 0.0
        %1104 = vmatprep.subr.mxu0 0.0
        %1105 = vmatpush2.msra.mxu0 0.0
        %1106 = vmatprep.subr.mxu0 0.0
        %1107 = vmatpush2.msra.mxu0 0.0
        %1108 = vmatprep.subr.mxu0 0.0
        %1109 = vmatpush2.msra.mxu0 0.0
        %1110 = vmatprep.subr.mxu0 0.0
        %1111 = vmatpush2.msra.mxu0 0.0
        %1112 = vmatprep.subr.mxu0 0.0
        %1113 = vmatpush2.msra.mxu0 0.0
        %1114 = vmatprep.subr.mxu0 0.0
        %1115 = vmatpush2.msra.mxu0 0.0
        %1116 = vmatprep.subr.mxu0 0.0
        %1117 = vmatpush2.msra.mxu0 0.0
        %1118 = vmatprep.subr.mxu0 0.0
        %1119 = vmatpush2.msra.mxu0 0.0
        %1120 = vmatprep.subr.mxu0 0.0
        %1121 = vmatpush2.msra.mxu0 0.0
        %1122 = vmatprep.subr.mxu0 0.0
        %1123 = vmatpush2.msra.mxu0 0.0
        %1124 = vmatprep.mubr.f32.mxu0 0.0
        %1125 = vmatmul.mubr.f32.gmra.mxu0 %v273
        %v1126 = vpop.f32.mrf.mxu0
        %v1127 = vadd.f32 0.0, %v1126
        %v1128 = vpop.f32.mrf.mxu0
        %1129 = vmatprep.mubr.f32.mxu0 0.0
        %1130 = vmatmul.mubr.f32.gmra.mxu0 %v276
        %v1131 = vpop.f32.mrf.mxu0
        %v1132 = vadd.f32 0.0, %v1131
        %v1133 = vpop.f32.mrf.mxu0
        %1134 = vdwg.mxu0
        %1135 = vmatprep.subr.mxu0 0.0
        %1136 = vmatpush1.msra.mxu0 0.0
        %1137 = vmatprep.subr.mxu0 0.0
        %1138 = vmatpush1.msra.mxu0 0.0
        %1139 = vmatprep.subr.mxu0 0.0
        %1140 = vmatpush1.msra.mxu0 0.0
        %1141 = vmatprep.subr.mxu0 0.0
        %1142 = vmatpush1.msra.mxu0 0.0
        %1143 = vmatprep.subr.mxu0 0.0
        %1144 = vmatpush1.msra.mxu0 0.0
        %1145 = vmatprep.subr.mxu0 0.0
        %1146 = vmatpush1.msra.mxu0 0.0
        %1147 = vmatprep.subr.mxu0 0.0
        %1148 = vmatpush1.msra.mxu0 0.0
        %1149 = vmatprep.subr.mxu0 0.0
        %1150 = vmatpush1.msra.mxu0 0.0
        %1151 = vmatprep.subr.mxu0 0.0
        %1152 = vmatpush1.msra.mxu0 0.0
        %1153 = vmatprep.subr.mxu0 0.0
        %1154 = vmatpush1.msra.mxu0 0.0
        %1155 = vmatprep.subr.mxu0 0.0
        %1156 = vmatpush1.msra.mxu0 0.0
        %1157 = vmatprep.subr.mxu0 0.0
        %1158 = vmatpush1.msra.mxu0 0.0
        %1159 = vmatprep.subr.mxu0 0.0
        %1160 = vmatpush1.msra.mxu0 %v909
        %1161 = vmatprep.subr.mxu0 0.0
        %1162 = vmatpush1.msra.mxu0 %v908
        %1163 = vmatprep.subr.mxu0 0.0
        %1164 = vmatpush1.msra.mxu0 %v907
        %1165 = vmatprep.subr.mxu0 0.0
        %1166 = vmatpush1.msra.mxu0 %v906
        %1167 = vmatprep.subr.mxu0 0.0
        %1168 = vmatpush2.msra.mxu0 0.0
        %1169 = vmatprep.subr.mxu0 0.0
        %1170 = vmatpush2.msra.mxu0 0.0
        %1171 = vmatprep.subr.mxu0 0.0
        %1172 = vmatpush2.msra.mxu0 0.0
        %1173 = vmatprep.subr.mxu0 0.0
        %1174 = vmatpush2.msra.mxu0 0.0
        %1175 = vmatprep.subr.mxu0 0.0
        %1176 = vmatpush2.msra.mxu0 0.0
        %1177 = vmatprep.subr.mxu0 0.0
        %1178 = vmatpush2.msra.mxu0 0.0
        %1179 = vmatprep.subr.mxu0 0.0
        %1180 = vmatpush2.msra.mxu0 0.0
        %1181 = vmatprep.subr.mxu0 0.0
        %1182 = vmatpush2.msra.mxu0 0.0
        %1183 = vmatprep.subr.mxu0 0.0
        %1184 = vmatpush2.msra.mxu0 0.0
        %1185 = vmatprep.subr.mxu0 0.0
        %1186 = vmatpush2.msra.mxu0 0.0
        %1187 = vmatprep.subr.mxu0 0.0
        %1188 = vmatpush2.msra.mxu0 0.0
        %1189 = vmatprep.subr.mxu0 0.0
        %1190 = vmatpush2.msra.mxu0 0.0
        %1191 = vmatprep.subr.mxu0 0.0
        %1192 = vmatpush2.msra.mxu0 0.0
        %1193 = vmatprep.subr.mxu0 0.0
        %1194 = vmatpush2.msra.mxu0 0.0
        %1195 = vmatprep.subr.mxu0 0.0
        %1196 = vmatpush2.msra.mxu0 0.0
        %1197 = vmatprep.subr.mxu0 0.0
        %1198 = vmatpush2.msra.mxu0 0.0
        %1199 = vmatprep.mubr.f32.mxu0 0.0
        %1200 = vmatmul.mubr.f32.gmra.mxu0 %v273
        %v1201 = vpop.f32.mrf.mxu0
        %v1202 = vadd.f32 0.0, %v1201
        %v1203 = vpop.f32.mrf.mxu0
        %1204 = vmatprep.mubr.f32.mxu0 0.0
        %1205 = vmatmul.mubr.f32.gmra.mxu0 %v276
        %v1206 = vpop.f32.mrf.mxu0
        %v1207 = vadd.f32 0.0, %v1206
        %v1208 = vpop.f32.mrf.mxu0
        %1209 = vdwg.mxu0
        %vm1210 = vcmask 130048
        %v1212 = vsel %vm1210, %v345, 0
        %v1215 = vsel %vm1210, %v661, 0
        %1217 = vmatprep.subr.mxu0 0.0
        %1218 = vmatpush1.xpose.msra.mxu0 0.0
        %1219 = vmatprep.subr.mxu0 0.0
        %1220 = vmatpush1.xpose.msra.mxu0 0.0
        %1221 = vmatprep.subr.mxu0 0.0
        %1222 = vmatpush1.xpose.msra.mxu0 0.0
        %1223 = vmatprep.subr.mxu0 0.0
        %1224 = vmatpush1.xpose.msra.mxu0 0.0
        %1225 = vmatprep.subr.mxu0 0.0
        %1226 = vmatpush1.xpose.msra.mxu0 0.0
        %1227 = vmatprep.subr.mxu0 0.0
        %1228 = vmatpush1.xpose.msra.mxu0 0.0
        %1229 = vmatprep.subr.mxu0 0.0
        %1230 = vmatpush1.xpose.msra.mxu0 0.0
        %1231 = vmatprep.subr.mxu0 0.0
        %1232 = vmatpush1.xpose.msra.mxu0 0.0
        %1233 = vmatprep.subr.mxu0 0.0
        %1234 = vmatpush1.xpose.msra.mxu0 0.0
        %1235 = vmatprep.subr.mxu0 0.0
        %1236 = vmatpush1.xpose.msra.mxu0 0.0
        %1237 = vmatprep.subr.mxu0 0.0
        %1238 = vmatpush1.xpose.msra.mxu0 0.0
        %1239 = vmatprep.subr.mxu0 0.0
        %1240 = vmatpush1.xpose.msra.mxu0 0.0
        %1241 = vmatprep.subr.mxu0 0.0
        %1242 = vmatpush1.xpose.msra.mxu0 0.0
        %1243 = vmatprep.subr.mxu0 0.0
        %1244 = vmatpush1.xpose.msra.mxu0 0.0
        %1245 = vmatprep.subr.mxu0 0.0
        %1246 = vmatpush1.xpose.msra.mxu0 0.0
        %1247 = vmatprep.subr.mxu0 0.0
        %1248 = vmatpush1.xpose.msra.mxu0 %v1215
        %1249 = vmatprep.subr.mxu0 0.0
        %1250 = vmatpush2.xpose.msra.mxu0 0.0
        %1251 = vmatprep.subr.mxu0 0.0
        %1252 = vmatpush2.xpose.msra.mxu0 0.0
        %1253 = vmatprep.subr.mxu0 0.0
        %1254 = vmatpush2.xpose.msra.mxu0 0.0
        %1255 = vmatprep.subr.mxu0 0.0
        %1256 = vmatpush2.xpose.msra.mxu0 0.0
        %1257 = vmatprep.subr.mxu0 0.0
        %1258 = vmatpush2.xpose.msra.mxu0 0.0
        %1259 = vmatprep.subr.mxu0 0.0
        %1260 = vmatpush2.xpose.msra.mxu0 0.0
        %1261 = vmatprep.subr.mxu0 0.0
        %1262 = vmatpush2.xpose.msra.mxu0 0.0
        %1263 = vmatprep.subr.mxu0 0.0
        %1264 = vmatpush2.xpose.msra.mxu0 0.0
        %1265 = vmatprep.subr.mxu0 0.0
        %1266 = vmatpush2.xpose.msra.mxu0 0.0
        %1267 = vmatprep.subr.mxu0 0.0
        %1268 = vmatpush2.xpose.msra.mxu0 0.0
        %1269 = vmatprep.subr.mxu0 0.0
        %1270 = vmatpush2.xpose.msra.mxu0 0.0
        %1271 = vmatprep.subr.mxu0 0.0
        %1272 = vmatpush2.xpose.msra.mxu0 0.0
        %1273 = vmatprep.subr.mxu0 0.0
        %1274 = vmatpush2.xpose.msra.mxu0 0.0
        %1275 = vmatprep.subr.mxu0 0.0
        %1276 = vmatpush2.xpose.msra.mxu0 0.0
        %1277 = vmatprep.subr.mxu0 0.0
        %1278 = vmatpush2.xpose.msra.mxu0 0.0
        %1279 = vmatprep.subr.mxu0 0.0
        %1280 = vmatpush2.xpose.msra.mxu0 0.0
        %1281 = vmatprep.mubr.f32.mxu0 0.0
        %1282 = vmatmul.mubr.f32.gmra.mxu0 %v1212
        %v1283 = vpop.f32.mrf.mxu0
        %v1284 = vadd.f32 0.0, %v1283
        %v1285 = vpop.f32.mrf.mxu0
        %1286 = vdwg.mxu0
        %v1288 = vsel %vm1210, %v350, 0
        %v1291 = vsel %vm1210, %v666, 0
        %1293 = vmatprep.subr.mxu0 0.0
        %1294 = vmatpush1.xpose.msra.mxu0 0.0
        %1295 = vmatprep.subr.mxu0 0.0
        %1296 = vmatpush1.xpose.msra.mxu0 0.0
        %1297 = vmatprep.subr.mxu0 0.0
        %1298 = vmatpush1.xpose.msra.mxu0 0.0
        %1299 = vmatprep.subr.mxu0 0.0
        %1300 = vmatpush1.xpose.msra.mxu0 0.0
        %1301 = vmatprep.subr.mxu0 0.0
        %1302 = vmatpush1.xpose.msra.mxu0 0.0
        %1303 = vmatprep.subr.mxu0 0.0
        %1304 = vmatpush1.xpose.msra.mxu0 0.0
        %1305 = vmatprep.subr.mxu0 0.0
        %1306 = vmatpush1.xpose.msra.mxu0 0.0
        %1307 = vmatprep.subr.mxu0 0.0
        %1308 = vmatpush1.xpose.msra.mxu0 0.0
        %1309 = vmatprep.subr.mxu0 0.0
        %1310 = vmatpush1.xpose.msra.mxu0 0.0
        %1311 = vmatprep.subr.mxu0 0.0
        %1312 = vmatpush1.xpose.msra.mxu0 0.0
        %1313 = vmatprep.subr.mxu0 0.0
        %1314 = vmatpush1.xpose.msra.mxu0 0.0
        %1315 = vmatprep.subr.mxu0 0.0
        %1316 = vmatpush1.xpose.msra.mxu0 0.0
        %1317 = vmatprep.subr.mxu0 0.0
        %1318 = vmatpush1.xpose.msra.mxu0 0.0
        %1319 = vmatprep.subr.mxu0 0.0
        %1320 = vmatpush1.xpose.msra.mxu0 0.0
        %1321 = vmatprep.subr.mxu0 0.0
        %1322 = vmatpush1.xpose.msra.mxu0 0.0
        %1323 = vmatprep.subr.mxu0 0.0
        %1324 = vmatpush1.xpose.msra.mxu0 %v1291
        %1325 = vmatprep.subr.mxu0 0.0
        %1326 = vmatpush2.xpose.msra.mxu0 0.0
        %1327 = vmatprep.subr.mxu0 0.0
        %1328 = vmatpush2.xpose.msra.mxu0 0.0
        %1329 = vmatprep.subr.mxu0 0.0
        %1330 = vmatpush2.xpose.msra.mxu0 0.0
        %1331 = vmatprep.subr.mxu0 0.0
        %1332 = vmatpush2.xpose.msra.mxu0 0.0
        %1333 = vmatprep.subr.mxu0 0.0
        %1334 = vmatpush2.xpose.msra.mxu0 0.0
        %1335 = vmatprep.subr.mxu0 0.0
        %1336 = vmatpush2.xpose.msra.mxu0 0.0
        %1337 = vmatprep.subr.mxu0 0.0
        %1338 = vmatpush2.xpose.msra.mxu0 0.0
        %1339 = vmatprep.subr.mxu0 0.0
        %1340 = vmatpush2.xpose.msra.mxu0 0.0
        %1341 = vmatprep.subr.mxu0 0.0
        %1342 = vmatpush2.xpose.msra.mxu0 0.0
        %1343 = vmatprep.subr.mxu0 0.0
        %1344 = vmatpush2.xpose.msra.mxu0 0.0
        %1345 = vmatprep.subr.mxu0 0.0
        %1346 = vmatpush2.xpose.msra.mxu0 0.0
        %1347 = vmatprep.subr.mxu0 0.0
        %1348 = vmatpush2.xpose.msra.mxu0 0.0
        %1349 = vmatprep.subr.mxu0 0.0
        %1350 = vmatpush2.xpose.msra.mxu0 0.0
        %1351 = vmatprep.subr.mxu0 0.0
        %1352 = vmatpush2.xpose.msra.mxu0 0.0
        %1353 = vmatprep.subr.mxu0 0.0
        %1354 = vmatpush2.xpose.msra.mxu0 0.0
        %1355 = vmatprep.subr.mxu0 0.0
        %1356 = vmatpush2.xpose.msra.mxu0 0.0
        %1357 = vmatprep.mubr.f32.mxu0 0.0
        %1358 = vmatmul.mubr.f32.gmra.mxu0 %v1288
        %v1359 = vpop.f32.mrf.mxu0
        %v1360 = vadd.f32 0.0, %v1359
        %v1361 = vpop.f32.mrf.mxu0
        %1362 = vdwg.mxu0
        %v1364 = vsel %vm1210, %v420, 0
        %v1367 = vsel %vm1210, %v736, 0
        %1369 = vmatprep.subr.mxu0 0.0
        %1370 = vmatpush1.xpose.msra.mxu0 0.0
        %1371 = vmatprep.subr.mxu0 0.0
        %1372 = vmatpush1.xpose.msra.mxu0 0.0
        %1373 = vmatprep.subr.mxu0 0.0
        %1374 = vmatpush1.xpose.msra.mxu0 0.0
        %1375 = vmatprep.subr.mxu0 0.0
        %1376 = vmatpush1.xpose.msra.mxu0 0.0
        %1377 = vmatprep.subr.mxu0 0.0
        %1378 = vmatpush1.xpose.msra.mxu0 0.0
        %1379 = vmatprep.subr.mxu0 0.0
        %1380 = vmatpush1.xpose.msra.mxu0 0.0
        %1381 = vmatprep.subr.mxu0 0.0
        %1382 = vmatpush1.xpose.msra.mxu0 0.0
        %1383 = vmatprep.subr.mxu0 0.0
        %1384 = vmatpush1.xpose.msra.mxu0 0.0
        %1385 = vmatprep.subr.mxu0 0.0
        %1386 = vmatpush1.xpose.msra.mxu0 0.0
        %1387 = vmatprep.subr.mxu0 0.0
        %1388 = vmatpush1.xpose.msra.mxu0 0.0
        %1389 = vmatprep.subr.mxu0 0.0
        %1390 = vmatpush1.xpose.msra.mxu0 0.0
        %1391 = vmatprep.subr.mxu0 0.0
        %1392 = vmatpush1.xpose.msra.mxu0 0.0
        %1393 = vmatprep.subr.mxu0 0.0
        %1394 = vmatpush1.xpose.msra.mxu0 0.0
        %1395 = vmatprep.subr.mxu0 0.0
        %1396 = vmatpush1.xpose.msra.mxu0 0.0
        %1397 = vmatprep.subr.mxu0 0.0
        %1398 = vmatpush1.xpose.msra.mxu0 0.0
        %1399 = vmatprep.subr.mxu0 0.0
        %1400 = vmatpush1.xpose.msra.mxu0 %v1367
        %1401 = vmatprep.subr.mxu0 0.0
        %1402 = vmatpush2.xpose.msra.mxu0 0.0
        %1403 = vmatprep.subr.mxu0 0.0
        %1404 = vmatpush2.xpose.msra.mxu0 0.0
        %1405 = vmatprep.subr.mxu0 0.0
        %1406 = vmatpush2.xpose.msra.mxu0 0.0
        %1407 = vmatprep.subr.mxu0 0.0
        %1408 = vmatpush2.xpose.msra.mxu0 0.0
        %1409 = vmatprep.subr.mxu0 0.0
        %1410 = vmatpush2.xpose.msra.mxu0 0.0
        %1411 = vmatprep.subr.mxu0 0.0
        %1412 = vmatpush2.xpose.msra.mxu0 0.0
        %1413 = vmatprep.subr.mxu0 0.0
        %1414 = vmatpush2.xpose.msra.mxu0 0.0
        %1415 = vmatprep.subr.mxu0 0.0
        %1416 = vmatpush2.xpose.msra.mxu0 0.0
        %1417 = vmatprep.subr.mxu0 0.0
        %1418 = vmatpush2.xpose.msra.mxu0 0.0
        %1419 = vmatprep.subr.mxu0 0.0
        %1420 = vmatpush2.xpose.msra.mxu0 0.0
        %1421 = vmatprep.subr.mxu0 0.0
        %1422 = vmatpush2.xpose.msra.mxu0 0.0
        %1423 = vmatprep.subr.mxu0 0.0
        %1424 = vmatpush2.xpose.msra.mxu0 0.0
        %1425 = vmatprep.subr.mxu0 0.0
        %1426 = vmatpush2.xpose.msra.mxu0 0.0
        %1427 = vmatprep.subr.mxu0 0.0
        %1428 = vmatpush2.xpose.msra.mxu0 0.0
        %1429 = vmatprep.subr.mxu0 0.0
        %1430 = vmatpush2.xpose.msra.mxu0 0.0
        %1431 = vmatprep.subr.mxu0 0.0
        %1432 = vmatpush2.xpose.msra.mxu0 0.0
        %1433 = vmatprep.mubr.f32.mxu0 0.0
        %1434 = vmatmul.mubr.f32.gmra.mxu0 %v1364
        %v1435 = vpop.f32.mrf.mxu0
        %v1436 = vadd.f32 0.0, %v1435
        %v1437 = vpop.f32.mrf.mxu0
        %1438 = vdwg.mxu0
        %v1440 = vsel %vm1210, %v425, 0
        %v1443 = vsel %vm1210, %v741, 0
        %1445 = vmatprep.subr.mxu0 0.0
        %1446 = vmatpush1.xpose.msra.mxu0 0.0
        %1447 = vmatprep.subr.mxu0 0.0
        %1448 = vmatpush1.xpose.msra.mxu0 0.0
        %1449 = vmatprep.subr.mxu0 0.0
        %1450 = vmatpush1.xpose.msra.mxu0 0.0
        %1451 = vmatprep.subr.mxu0 0.0
        %1452 = vmatpush1.xpose.msra.mxu0 0.0
        %1453 = vmatprep.subr.mxu0 0.0
        %1454 = vmatpush1.xpose.msra.mxu0 0.0
        %1455 = vmatprep.subr.mxu0 0.0
        %1456 = vmatpush1.xpose.msra.mxu0 0.0
        %1457 = vmatprep.subr.mxu0 0.0
        %1458 = vmatpush1.xpose.msra.mxu0 0.0
        %1459 = vmatprep.subr.mxu0 0.0
        %1460 = vmatpush1.xpose.msra.mxu0 0.0
        %1461 = vmatprep.subr.mxu0 0.0
        %1462 = vmatpush1.xpose.msra.mxu0 0.0
        %1463 = vmatprep.subr.mxu0 0.0
        %1464 = vmatpush1.xpose.msra.mxu0 0.0
        %1465 = vmatprep.subr.mxu0 0.0
        %1466 = vmatpush1.xpose.msra.mxu0 0.0
        %1467 = vmatprep.subr.mxu0 0.0
        %1468 = vmatpush1.xpose.msra.mxu0 0.0
        %1469 = vmatprep.subr.mxu0 0.0
        %1470 = vmatpush1.xpose.msra.mxu0 0.0
        %1471 = vmatprep.subr.mxu0 0.0
        %1472 = vmatpush1.xpose.msra.mxu0 0.0
        %1473 = vmatprep.subr.mxu0 0.0
        %1474 = vmatpush1.xpose.msra.mxu0 0.0
        %1475 = vmatprep.subr.mxu0 0.0
        %1476 = vmatpush1.xpose.msra.mxu0 %v1443
        %1477 = vmatprep.subr.mxu0 0.0
        %1478 = vmatpush2.xpose.msra.mxu0 0.0
        %1479 = vmatprep.subr.mxu0 0.0
        %1480 = vmatpush2.xpose.msra.mxu0 0.0
        %1481 = vmatprep.subr.mxu0 0.0
        %1482 = vmatpush2.xpose.msra.mxu0 0.0
        %1483 = vmatprep.subr.mxu0 0.0
        %1484 = vmatpush2.xpose.msra.mxu0 0.0
        %1485 = vmatprep.subr.mxu0 0.0
        %1486 = vmatpush2.xpose.msra.mxu0 0.0
        %1487 = vmatprep.subr.mxu0 0.0
        %1488 = vmatpush2.xpose.msra.mxu0 0.0
        %1489 = vmatprep.subr.mxu0 0.0
        %1490 = vmatpush2.xpose.msra.mxu0 0.0
        %1491 = vmatprep.subr.mxu0 0.0
        %1492 = vmatpush2.xpose.msra.mxu0 0.0
        %1493 = vmatprep.subr.mxu0 0.0
        %1494 = vmatpush2.xpose.msra.mxu0 0.0
        %1495 = vmatprep.subr.mxu0 0.0
        %1496 = vmatpush2.xpose.msra.mxu0 0.0
        %1497 = vmatprep.subr.mxu0 0.0
        %1498 = vmatpush2.xpose.msra.mxu0 0.0
        %1499 = vmatprep.subr.mxu0 0.0
        %1500 = vmatpush2.xpose.msra.mxu0 0.0
        %1501 = vmatprep.subr.mxu0 0.0
        %1502 = vmatpush2.xpose.msra.mxu0 0.0
        %1503 = vmatprep.subr.mxu0 0.0
        %1504 = vmatpush2.xpose.msra.mxu0 0.0
        %1505 = vmatprep.subr.mxu0 0.0
        %1506 = vmatpush2.xpose.msra.mxu0 0.0
        %1507 = vmatprep.subr.mxu0 0.0
        %1508 = vmatpush2.xpose.msra.mxu0 0.0
        %1509 = vmatprep.mubr.f32.mxu0 0.0
        %1510 = vmatmul.mubr.f32.gmra.mxu0 %v1440
        %v1511 = vpop.f32.mrf.mxu0
        %v1512 = vadd.f32 0.0, %v1511
        %v1513 = vpop.f32.mrf.mxu0
        %1514 = vdwg.mxu0
        %v1516 = vsel %vm1210, %v495, 0
        %v1519 = vsel %vm1210, %v811, 0
        %1521 = vmatprep.subr.mxu0 0.0
        %1522 = vmatpush1.xpose.msra.mxu0 0.0
        %1523 = vmatprep.subr.mxu0 0.0
        %1524 = vmatpush1.xpose.msra.mxu0 0.0
        %1525 = vmatprep.subr.mxu0 0.0
        %1526 = vmatpush1.xpose.msra.mxu0 0.0
        %1527 = vmatprep.subr.mxu0 0.0
        %1528 = vmatpush1.xpose.msra.mxu0 0.0
        %1529 = vmatprep.subr.mxu0 0.0
        %1530 = vmatpush1.xpose.msra.mxu0 0.0
        %1531 = vmatprep.subr.mxu0 0.0
        %1532 = vmatpush1.xpose.msra.mxu0 0.0
        %1533 = vmatprep.subr.mxu0 0.0
        %1534 = vmatpush1.xpose.msra.mxu0 0.0
        %1535 = vmatprep.subr.mxu0 0.0
        %1536 = vmatpush1.xpose.msra.mxu0 0.0
        %1537 = vmatprep.subr.mxu0 0.0
        %1538 = vmatpush1.xpose.msra.mxu0 0.0
        %1539 = vmatprep.subr.mxu0 0.0
        %1540 = vmatpush1.xpose.msra.mxu0 0.0
        %1541 = vmatprep.subr.mxu0 0.0
        %1542 = vmatpush1.xpose.msra.mxu0 0.0
        %1543 = vmatprep.subr.mxu0 0.0
        %1544 = vmatpush1.xpose.msra.mxu0 0.0
        %1545 = vmatprep.subr.mxu0 0.0
        %1546 = vmatpush1.xpose.msra.mxu0 0.0
        %1547 = vmatprep.subr.mxu0 0.0
        %1548 = vmatpush1.xpose.msra.mxu0 0.0
        %1549 = vmatprep.subr.mxu0 0.0
        %1550 = vmatpush1.xpose.msra.mxu0 0.0
        %1551 = vmatprep.subr.mxu0 0.0
        %1552 = vmatpush1.xpose.msra.mxu0 %v1519
        %1553 = vmatprep.subr.mxu0 0.0
        %1554 = vmatpush2.xpose.msra.mxu0 0.0
        %1555 = vmatprep.subr.mxu0 0.0
        %1556 = vmatpush2.xpose.msra.mxu0 0.0
        %1557 = vmatprep.subr.mxu0 0.0
        %1558 = vmatpush2.xpose.msra.mxu0 0.0
        %1559 = vmatprep.subr.mxu0 0.0
        %1560 = vmatpush2.xpose.msra.mxu0 0.0
        %1561 = vmatprep.subr.mxu0 0.0
        %1562 = vmatpush2.xpose.msra.mxu0 0.0
        %1563 = vmatprep.subr.mxu0 0.0
        %1564 = vmatpush2.xpose.msra.mxu0 0.0
        %1565 = vmatprep.subr.mxu0 0.0
        %1566 = vmatpush2.xpose.msra.mxu0 0.0
        %1567 = vmatprep.subr.mxu0 0.0
        %1568 = vmatpush2.xpose.msra.mxu0 0.0
        %1569 = vmatprep.subr.mxu0 0.0
        %1570 = vmatpush2.xpose.msra.mxu0 0.0
        %1571 = vmatprep.subr.mxu0 0.0
        %1572 = vmatpush2.xpose.msra.mxu0 0.0
        %1573 = vmatprep.subr.mxu0 0.0
        %1574 = vmatpush2.xpose.msra.mxu0 0.0
        %1575 = vmatprep.subr.mxu0 0.0
        %1576 = vmatpush2.xpose.msra.mxu0 0.0
        %1577 = vmatprep.subr.mxu0 0.0
        %1578 = vmatpush2.xpose.msra.mxu0 0.0
        %1579 = vmatprep.subr.mxu0 0.0
        %1580 = vmatpush2.xpose.msra.mxu0 0.0
        %1581 = vmatprep.subr.mxu0 0.0
        %1582 = vmatpush2.xpose.msra.mxu0 0.0
        %1583 = vmatprep.subr.mxu0 0.0
        %1584 = vmatpush2.xpose.msra.mxu0 0.0
        %1585 = vmatprep.mubr.f32.mxu0 0.0
        %1586 = vmatmul.mubr.f32.gmra.mxu0 %v1516
        %v1587 = vpop.f32.mrf.mxu0
        %v1588 = vadd.f32 0.0, %v1587
        %v1589 = vpop.f32.mrf.mxu0
        %1590 = vdwg.mxu0
        %v1592 = vsel %vm1210, %v500, 0
        %v1595 = vsel %vm1210, %v816, 0
        %1597 = vmatprep.subr.mxu0 0.0
        %1598 = vmatpush1.xpose.msra.mxu0 0.0
        %1599 = vmatprep.subr.mxu0 0.0
        %1600 = vmatpush1.xpose.msra.mxu0 0.0
        %1601 = vmatprep.subr.mxu0 0.0
        %1602 = vmatpush1.xpose.msra.mxu0 0.0
        %1603 = vmatprep.subr.mxu0 0.0
        %1604 = vmatpush1.xpose.msra.mxu0 0.0
        %1605 = vmatprep.subr.mxu0 0.0
        %1606 = vmatpush1.xpose.msra.mxu0 0.0
        %1607 = vmatprep.subr.mxu0 0.0
        %1608 = vmatpush1.xpose.msra.mxu0 0.0
        %1609 = vmatprep.subr.mxu0 0.0
        %1610 = vmatpush1.xpose.msra.mxu0 0.0
        %1611 = vmatprep.subr.mxu0 0.0
        %1612 = vmatpush1.xpose.msra.mxu0 0.0
        %1613 = vmatprep.subr.mxu0 0.0
        %1614 = vmatpush1.xpose.msra.mxu0 0.0
        %1615 = vmatprep.subr.mxu0 0.0
        %1616 = vmatpush1.xpose.msra.mxu0 0.0
        %1617 = vmatprep.subr.mxu0 0.0
        %1618 = vmatpush1.xpose.msra.mxu0 0.0
        %1619 = vmatprep.subr.mxu0 0.0
        %1620 = vmatpush1.xpose.msra.mxu0 0.0
        %1621 = vmatprep.subr.mxu0 0.0
        %1622 = vmatpush1.xpose.msra.mxu0 0.0
        %1623 = vmatprep.subr.mxu0 0.0
        %1624 = vmatpush1.xpose.msra.mxu0 0.0
        %1625 = vmatprep.subr.mxu0 0.0
        %1626 = vmatpush1.xpose.msra.mxu0 0.0
        %1627 = vmatprep.subr.mxu0 0.0
        %1628 = vmatpush1.xpose.msra.mxu0 %v1595
        %1629 = vmatprep.subr.mxu0 0.0
        %1630 = vmatpush2.xpose.msra.mxu0 0.0
        %1631 = vmatprep.subr.mxu0 0.0
        %1632 = vmatpush2.xpose.msra.mxu0 0.0
        %1633 = vmatprep.subr.mxu0 0.0
        %1634 = vmatpush2.xpose.msra.mxu0 0.0
        %1635 = vmatprep.subr.mxu0 0.0
        %1636 = vmatpush2.xpose.msra.mxu0 0.0
        %1637 = vmatprep.subr.mxu0 0.0
        %1638 = vmatpush2.xpose.msra.mxu0 0.0
        %1639 = vmatprep.subr.mxu0 0.0
        %1640 = vmatpush2.xpose.msra.mxu0 0.0
        %1641 = vmatprep.subr.mxu0 0.0
        %1642 = vmatpush2.xpose.msra.mxu0 0.0
        %1643 = vmatprep.subr.mxu0 0.0
        %1644 = vmatpush2.xpose.msra.mxu0 0.0
        %1645 = vmatprep.subr.mxu0 0.0
        %1646 = vmatpush2.xpose.msra.mxu0 0.0
        %1647 = vmatprep.subr.mxu0 0.0
        %1648 = vmatpush2.xpose.msra.mxu0 0.0
        %1649 = vmatprep.subr.mxu0 0.0
        %1650 = vmatpush2.xpose.msra.mxu0 0.0
        %1651 = vmatprep.subr.mxu0 0.0
        %1652 = vmatpush2.xpose.msra.mxu0 0.0
        %1653 = vmatprep.subr.mxu0 0.0
        %1654 = vmatpush2.xpose.msra.mxu0 0.0
        %1655 = vmatprep.subr.mxu0 0.0
        %1656 = vmatpush2.xpose.msra.mxu0 0.0
        %1657 = vmatprep.subr.mxu0 0.0
        %1658 = vmatpush2.xpose.msra.mxu0 0.0
        %1659 = vmatprep.subr.mxu0 0.0
        %1660 = vmatpush2.xpose.msra.mxu0 0.0
        %1661 = vmatprep.mubr.f32.mxu0 0.0
        %1662 = vmatmul.mubr.f32.gmra.mxu0 %v1592
        %v1663 = vpop.f32.mrf.mxu0
        %v1664 = vadd.f32 0.0, %v1663
        %v1665 = vpop.f32.mrf.mxu0
        %1666 = vdwg.mxu0
        %v1668 = vsel %vm1210, %v570, 0
        %v1671 = vsel %vm1210, %v886, 0
        %1673 = vmatprep.subr.mxu0 0.0
        %1674 = vmatpush1.xpose.msra.mxu0 0.0
        %1675 = vmatprep.subr.mxu0 0.0
        %1676 = vmatpush1.xpose.msra.mxu0 0.0
        %1677 = vmatprep.subr.mxu0 0.0
        %1678 = vmatpush1.xpose.msra.mxu0 0.0
        %1679 = vmatprep.subr.mxu0 0.0
        %1680 = vmatpush1.xpose.msra.mxu0 0.0
        %1681 = vmatprep.subr.mxu0 0.0
        %1682 = vmatpush1.xpose.msra.mxu0 0.0
        %1683 = vmatprep.subr.mxu0 0.0
        %1684 = vmatpush1.xpose.msra.mxu0 0.0
        %1685 = vmatprep.subr.mxu0 0.0
        %1686 = vmatpush1.xpose.msra.mxu0 0.0
        %1687 = vmatprep.subr.mxu0 0.0
        %1688 = vmatpush1.xpose.msra.mxu0 0.0
        %1689 = vmatprep.subr.mxu0 0.0
        %1690 = vmatpush1.xpose.msra.mxu0 0.0
        %1691 = vmatprep.subr.mxu0 0.0
        %1692 = vmatpush1.xpose.msra.mxu0 0.0
        %1693 = vmatprep.subr.mxu0 0.0
        %1694 = vmatpush1.xpose.msra.mxu0 0.0
        %1695 = vmatprep.subr.mxu0 0.0
        %1696 = vmatpush1.xpose.msra.mxu0 0.0
        %1697 = vmatprep.subr.mxu0 0.0
        %1698 = vmatpush1.xpose.msra.mxu0 0.0
        %1699 = vmatprep.subr.mxu0 0.0
        %1700 = vmatpush1.xpose.msra.mxu0 0.0
        %1701 = vmatprep.subr.mxu0 0.0
        %1702 = vmatpush1.xpose.msra.mxu0 0.0
        %1703 = vmatprep.subr.mxu0 0.0
        %1704 = vmatpush1.xpose.msra.mxu0 %v1671
        %1705 = vmatprep.subr.mxu0 0.0
        %1706 = vmatpush2.xpose.msra.mxu0 0.0
        %1707 = vmatprep.subr.mxu0 0.0
        %1708 = vmatpush2.xpose.msra.mxu0 0.0
        %1709 = vmatprep.subr.mxu0 0.0
        %1710 = vmatpush2.xpose.msra.mxu0 0.0
        %1711 = vmatprep.subr.mxu0 0.0
        %1712 = vmatpush2.xpose.msra.mxu0 0.0
        %1713 = vmatprep.subr.mxu0 0.0
        %1714 = vmatpush2.xpose.msra.mxu0 0.0
        %1715 = vmatprep.subr.mxu0 0.0
        %1716 = vmatpush2.xpose.msra.mxu0 0.0
        %1717 = vmatprep.subr.mxu0 0.0
        %1718 = vmatpush2.xpose.msra.mxu0 0.0
        %1719 = vmatprep.subr.mxu0 0.0
        %1720 = vmatpush2.xpose.msra.mxu0 0.0
        %1721 = vmatprep.subr.mxu0 0.0
        %1722 = vmatpush2.xpose.msra.mxu0 0.0
        %1723 = vmatprep.subr.mxu0 0.0
        %1724 = vmatpush2.xpose.msra.mxu0 0.0
        %1725 = vmatprep.subr.mxu0 0.0
        %1726 = vmatpush2.xpose.msra.mxu0 0.0
        %1727 = vmatprep.subr.mxu0 0.0
        %1728 = vmatpush2.xpose.msra.mxu0 0.0
        %1729 = vmatprep.subr.mxu0 0.0
        %1730 = vmatpush2.xpose.msra.mxu0 0.0
        %1731 = vmatprep.subr.mxu0 0.0
        %1732 = vmatpush2.xpose.msra.mxu0 0.0
        %1733 = vmatprep.subr.mxu0 0.0
        %1734 = vmatpush2.xpose.msra.mxu0 0.0
        %1735 = vmatprep.subr.mxu0 0.0
        %1736 = vmatpush2.xpose.msra.mxu0 0.0
        %1737 = vmatprep.mubr.f32.mxu0 0.0
        %1738 = vmatmul.mubr.f32.gmra.mxu0 %v1668
        %v1739 = vpop.f32.mrf.mxu0
        %v1740 = vadd.f32 0.0, %v1739
        %v1741 = vpop.f32.mrf.mxu0
        %1742 = vdwg.mxu0
        %v1744 = vsel %vm1210, %v575, 0
        %v1747 = vsel %vm1210, %v891, 0
        %1749 = vmatprep.subr.mxu0 0.0
        %1750 = vmatpush1.xpose.msra.mxu0 0.0
        %1751 = vmatprep.subr.mxu0 0.0
        %1752 = vmatpush1.xpose.msra.mxu0 0.0
        %1753 = vmatprep.subr.mxu0 0.0
        %1754 = vmatpush1.xpose.msra.mxu0 0.0
        %1755 = vmatprep.subr.mxu0 0.0
        %1756 = vmatpush1.xpose.msra.mxu0 0.0
        %1757 = vmatprep.subr.mxu0 0.0
        %1758 = vmatpush1.xpose.msra.mxu0 0.0
        %1759 = vmatprep.subr.mxu0 0.0
        %1760 = vmatpush1.xpose.msra.mxu0 0.0
        %1761 = vmatprep.subr.mxu0 0.0
        %1762 = vmatpush1.xpose.msra.mxu0 0.0
        %1763 = vmatprep.subr.mxu0 0.0
        %1764 = vmatpush1.xpose.msra.mxu0 0.0
        %1765 = vmatprep.subr.mxu0 0.0
        %1766 = vmatpush1.xpose.msra.mxu0 0.0
        %1767 = vmatprep.subr.mxu0 0.0
        %1768 = vmatpush1.xpose.msra.mxu0 0.0
        %1769 = vmatprep.subr.mxu0 0.0
        %1770 = vmatpush1.xpose.msra.mxu0 0.0
        %1771 = vmatprep.subr.mxu0 0.0
        %1772 = vmatpush1.xpose.msra.mxu0 0.0
        %1773 = vmatprep.subr.mxu0 0.0
        %1774 = vmatpush1.xpose.msra.mxu0 0.0
        %1775 = vmatprep.subr.mxu0 0.0
        %1776 = vmatpush1.xpose.msra.mxu0 0.0
        %1777 = vmatprep.subr.mxu0 0.0
        %1778 = vmatpush1.xpose.msra.mxu0 0.0
        %1779 = vmatprep.subr.mxu0 0.0
        %1780 = vmatpush1.xpose.msra.mxu0 %v1747
        %1781 = vmatprep.subr.mxu0 0.0
        %1782 = vmatpush2.xpose.msra.mxu0 0.0
        %1783 = vmatprep.subr.mxu0 0.0
        %1784 = vmatpush2.xpose.msra.mxu0 0.0
        %1785 = vmatprep.subr.mxu0 0.0
        %1786 = vmatpush2.xpose.msra.mxu0 0.0
        %1787 = vmatprep.subr.mxu0 0.0
        %1788 = vmatpush2.xpose.msra.mxu0 0.0
        %1789 = vmatprep.subr.mxu0 0.0
        %1790 = vmatpush2.xpose.msra.mxu0 0.0
        %1791 = vmatprep.subr.mxu0 0.0
        %1792 = vmatpush2.xpose.msra.mxu0 0.0
        %1793 = vmatprep.subr.mxu0 0.0
        %1794 = vmatpush2.xpose.msra.mxu0 0.0
        %1795 = vmatprep.subr.mxu0 0.0
        %1796 = vmatpush2.xpose.msra.mxu0 0.0
        %1797 = vmatprep.subr.mxu0 0.0
        %1798 = vmatpush2.xpose.msra.mxu0 0.0
        %1799 = vmatprep.subr.mxu0 0.0
        %1800 = vmatpush2.xpose.msra.mxu0 0.0
        %1801 = vmatprep.subr.mxu0 0.0
        %1802 = vmatpush2.xpose.msra.mxu0 0.0
        %1803 = vmatprep.subr.mxu0 0.0
        %1804 = vmatpush2.xpose.msra.mxu0 0.0
        %1805 = vmatprep.subr.mxu0 0.0
        %1806 = vmatpush2.xpose.msra.mxu0 0.0
        %1807 = vmatprep.subr.mxu0 0.0
        %1808 = vmatpush2.xpose.msra.mxu0 0.0
        %1809 = vmatprep.subr.mxu0 0.0
        %1810 = vmatpush2.xpose.msra.mxu0 0.0
        %1811 = vmatprep.subr.mxu0 0.0
        %1812 = vmatpush2.xpose.msra.mxu0 0.0
        %1813 = vmatprep.mubr.f32.mxu0 0.0
        %1814 = vmatmul.mubr.f32.gmra.mxu0 %v1744
        %v1815 = vpop.f32.mrf.mxu0
        %v1816 = vadd.f32 0.0, %v1815
        %v1817 = vpop.f32.mrf.mxu0
        %1818 = vdwg.mxu0
        %vm1819 = vcmask 64512
        %v1820 = vsel %vm1819, %v1284, -inf
        %1821 = vmax.xlane.f32.xlu0 %v1820
        %v1822 = vpop.xlane.xlu0 %1821
        %v1823 = vsel %vm1819, %v1360, -inf
        %1824 = vmax.xlane.f32.xlu0 %v1823
        %v1825 = vpop.xlane.xlu0 %1824
        %v1826 = vsel %vm1819, %v1436, -inf
        %1827 = vmax.xlane.f32.xlu0 %v1826
        %v1828 = vpop.xlane.xlu0 %1827
        %v1829 = vsel %vm1819, %v1512, -inf
        %1830 = vmax.xlane.f32.xlu0 %v1829
        %v1831 = vpop.xlane.xlu0 %1830
        %v1832 = vsel %vm1819, %v1588, -inf
        %1833 = vmax.xlane.f32.xlu0 %v1832
        %v1834 = vpop.xlane.xlu0 %1833
        %v1835 = vsel %vm1819, %v1664, -inf
        %1836 = vmax.xlane.f32.xlu0 %v1835
        %v1837 = vpop.xlane.xlu0 %1836
        %v1838 = vsel %vm1819, %v1740, -inf
        %1839 = vmax.xlane.f32.xlu0 %v1838
        %v1840 = vpop.xlane.xlu0 %1839
        %v1841 = vsel %vm1819, %v1816, -inf
        %1842 = vmax.xlane.f32.xlu0 %v1841
        %v1843 = vpop.xlane.xlu0 %1842
        %v1844 = vsub.f32 %v1284, %v1822
        %v1845 = vsub.f32 %v1360, %v1825
        %v1846 = vsub.f32 %v1436, %v1828
        %v1847 = vsub.f32 %v1512, %v1831
        %v1848 = vsub.f32 %v1588, %v1834
        %v1849 = vsub.f32 %v1664, %v1837
        %v1850 = vsub.f32 %v1740, %v1840
        %v1851 = vsub.f32 %v1816, %v1843
        %v1852 = vmul.f32 %v1844, 1.442695
        %v1853 = vpow.pop %v1852
        %v1854 = vmul.f32 %v1845, 1.442695
        %v1855 = vpow.pop %v1854
        %v1856 = vmul.f32 %v1846, 1.442695
        %v1857 = vpow.pop %v1856
        %v1858 = vmul.f32 %v1847, 1.442695
        %v1859 = vpow.pop %v1858
        %v1860 = vmul.f32 %v1848, 1.442695
        %v1861 = vpow.pop %v1860
        %v1862 = vmul.f32 %v1849, 1.442695
        %v1863 = vpow.pop %v1862
        %v1864 = vmul.f32 %v1850, 1.442695
        %v1865 = vpow.pop %v1864
        %v1866 = vmul.f32 %v1851, 1.442695
        %v1867 = vpow.pop %v1866
        %v1868 = vsel %vm1819, %v1853, 0.0
        %1869 = vadd.xlane.f32.xlu0 %v1868
        %v1870 = vpop.xlane.xlu0 %1869
        %v1871 = vsel %vm1819, %v1855, 0.0
        %1872 = vadd.xlane.f32.xlu0 %v1871
        %v1873 = vpop.xlane.xlu0 %1872
        %v1874 = vsel %vm1819, %v1857, 0.0
        %1875 = vadd.xlane.f32.xlu0 %v1874
        %v1876 = vpop.xlane.xlu0 %1875
        %v1877 = vsel %vm1819, %v1859, 0.0
        %1878 = vadd.xlane.f32.xlu0 %v1877
        %v1879 = vpop.xlane.xlu0 %1878
        %v1880 = vsel %vm1819, %v1861, 0.0
        %1881 = vadd.xlane.f32.xlu0 %v1880
        %v1882 = vpop.xlane.xlu0 %1881
        %v1883 = vsel %vm1819, %v1863, 0.0
        %1884 = vadd.xlane.f32.xlu0 %v1883
        %v1885 = vpop.xlane.xlu0 %1884
        %v1886 = vsel %vm1819, %v1865, 0.0
        %1887 = vadd.xlane.f32.xlu0 %v1886
        %v1888 = vpop.xlane.xlu0 %1887
        %v1889 = vsel %vm1819, %v1867, 0.0
        %1890 = vadd.xlane.f32.xlu0 %v1889
        %v1891 = vpop.xlane.xlu0 %1890
        %v1892 = vrcp.pop %v1870
        %v1893 = vrcp.pop %v1873
        %v1894 = vrcp.pop %v1876
        %v1895 = vrcp.pop %v1879
        %v1896 = vrcp.pop %v1882
        %v1897 = vrcp.pop %v1885
        %v1898 = vrcp.pop %v1888
        %v1899 = vrcp.pop %v1891
        %v1900 = vmul.f32 %v1853, %v1892
        %v1901 = vmul.f32 %v1855, %v1893
        %v1902 = vmul.f32 %v1857, %v1894
        %v1903 = vmul.f32 %v1859, %v1895
        %v1904 = vmul.f32 %v1861, %v1896
        %v1905 = vmul.f32 %v1863, %v1897
        %v1906 = vmul.f32 %v1865, %v1898
        %v1907 = vmul.f32 %v1867, %v1899
        %v1909 = vsel %vm1819, %v1900, 0
        %1911 = vmatprep.subr.mxu0 0.0
        %1912 = vmatpush1.msra.mxu0 0.0
        %1913 = vmatprep.subr.mxu0 0.0
        %1914 = vmatpush1.msra.mxu0 0.0
        %1915 = vmatprep.subr.mxu0 0.0
        %1916 = vmatpush1.msra.mxu0 0.0
        %1917 = vmatprep.subr.mxu0 0.0
        %1918 = vmatpush1.msra.mxu0 0.0
        %1919 = vmatprep.subr.mxu0 0.0
        %1920 = vmatpush1.msra.mxu0 0.0
        %1921 = vmatprep.subr.mxu0 0.0
        %1922 = vmatpush1.msra.mxu0 0.0
        %1923 = vmatprep.subr.mxu0 0.0
        %1924 = vmatpush1.msra.mxu0 0.0
        %1925 = vmatprep.subr.mxu0 0.0
        %1926 = vmatpush1.msra.mxu0 0.0
        %1927 = vmatprep.subr.mxu0 0.0
        %1928 = vmatpush1.msra.mxu0 0.0
        %1929 = vmatprep.subr.mxu0 0.0
        %1930 = vmatpush1.msra.mxu0 0.0
        %1931 = vmatprep.subr.mxu0 0.0
        %1932 = vmatpush1.msra.mxu0 0.0
        %1933 = vmatprep.subr.mxu0 0.0
        %1934 = vmatpush1.msra.mxu0 0.0
        %1935 = vmatprep.subr.mxu0 0.0
        %1936 = vmatpush1.msra.mxu0 0.0
        %1937 = vmatprep.subr.mxu0 0.0
        %1938 = vmatpush1.msra.mxu0 0.0
        %1939 = vmatprep.subr.mxu0 0.0
        %1940 = vmatpush1.msra.mxu0 0.0
        %1941 = vmatprep.subr.mxu0 0.0
        %1942 = vmatpush1.msra.mxu0 %v977
        %1943 = vmatprep.subr.mxu0 0.0
        %1944 = vmatpush2.msra.mxu0 0.0
        %1945 = vmatprep.subr.mxu0 0.0
        %1946 = vmatpush2.msra.mxu0 0.0
        %1947 = vmatprep.subr.mxu0 0.0
        %1948 = vmatpush2.msra.mxu0 0.0
        %1949 = vmatprep.subr.mxu0 0.0
        %1950 = vmatpush2.msra.mxu0 0.0
        %1951 = vmatprep.subr.mxu0 0.0
        %1952 = vmatpush2.msra.mxu0 0.0
        %1953 = vmatprep.subr.mxu0 0.0
        %1954 = vmatpush2.msra.mxu0 0.0
        %1955 = vmatprep.subr.mxu0 0.0
        %1956 = vmatpush2.msra.mxu0 0.0
        %1957 = vmatprep.subr.mxu0 0.0
        %1958 = vmatpush2.msra.mxu0 0.0
        %1959 = vmatprep.subr.mxu0 0.0
        %1960 = vmatpush2.msra.mxu0 0.0
        %1961 = vmatprep.subr.mxu0 0.0
        %1962 = vmatpush2.msra.mxu0 0.0
        %1963 = vmatprep.subr.mxu0 0.0
        %1964 = vmatpush2.msra.mxu0 0.0
        %1965 = vmatprep.subr.mxu0 0.0
        %1966 = vmatpush2.msra.mxu0 0.0
        %1967 = vmatprep.subr.mxu0 0.0
        %1968 = vmatpush2.msra.mxu0 0.0
        %1969 = vmatprep.subr.mxu0 0.0
        %1970 = vmatpush2.msra.mxu0 0.0
        %1971 = vmatprep.subr.mxu0 0.0
        %1972 = vmatpush2.msra.mxu0 0.0
        %1973 = vmatprep.subr.mxu0 0.0
        %1974 = vmatpush2.msra.mxu0 0.0
        %1975 = vmatprep.mubr.f32.mxu0 0.0
        %1976 = vmatmul.mubr.f32.gmra.mxu0 %v1909
        %v1977 = vpop.f32.mrf.mxu0
        %v1978 = vadd.f32 0.0, %v1977
        %v1979 = vpop.f32.mrf.mxu0
        %1980 = vdwg.mxu0
        %v1982 = vsel %vm1819, %v1901, 0
        %1984 = vmatprep.subr.mxu0 0.0
        %1985 = vmatpush1.msra.mxu0 0.0
        %1986 = vmatprep.subr.mxu0 0.0
        %1987 = vmatpush1.msra.mxu0 0.0
        %1988 = vmatprep.subr.mxu0 0.0
        %1989 = vmatpush1.msra.mxu0 0.0
        %1990 = vmatprep.subr.mxu0 0.0
        %1991 = vmatpush1.msra.mxu0 0.0
        %1992 = vmatprep.subr.mxu0 0.0
        %1993 = vmatpush1.msra.mxu0 0.0
        %1994 = vmatprep.subr.mxu0 0.0
        %1995 = vmatpush1.msra.mxu0 0.0
        %1996 = vmatprep.subr.mxu0 0.0
        %1997 = vmatpush1.msra.mxu0 0.0
        %1998 = vmatprep.subr.mxu0 0.0
        %1999 = vmatpush1.msra.mxu0 0.0
        %2000 = vmatprep.subr.mxu0 0.0
        %2001 = vmatpush1.msra.mxu0 0.0
        %2002 = vmatprep.subr.mxu0 0.0
        %2003 = vmatpush1.msra.mxu0 0.0
        %2004 = vmatprep.subr.mxu0 0.0
        %2005 = vmatpush1.msra.mxu0 0.0
        %2006 = vmatprep.subr.mxu0 0.0
        %2007 = vmatpush1.msra.mxu0 0.0
        %2008 = vmatprep.subr.mxu0 0.0
        %2009 = vmatpush1.msra.mxu0 0.0
        %2010 = vmatprep.subr.mxu0 0.0
        %2011 = vmatpush1.msra.mxu0 0.0
        %2012 = vmatprep.subr.mxu0 0.0
        %2013 = vmatpush1.msra.mxu0 0.0
        %2014 = vmatprep.subr.mxu0 0.0
        %2015 = vmatpush1.msra.mxu0 %v982
        %2016 = vmatprep.subr.mxu0 0.0
        %2017 = vmatpush2.msra.mxu0 0.0
        %2018 = vmatprep.subr.mxu0 0.0
        %2019 = vmatpush2.msra.mxu0 0.0
        %2020 = vmatprep.subr.mxu0 0.0
        %2021 = vmatpush2.msra.mxu0 0.0
        %2022 = vmatprep.subr.mxu0 0.0
        %2023 = vmatpush2.msra.mxu0 0.0
        %2024 = vmatprep.subr.mxu0 0.0
        %2025 = vmatpush2.msra.mxu0 0.0
        %2026 = vmatprep.subr.mxu0 0.0
        %2027 = vmatpush2.msra.mxu0 0.0
        %2028 = vmatprep.subr.mxu0 0.0
        %2029 = vmatpush2.msra.mxu0 0.0
        %2030 = vmatprep.subr.mxu0 0.0
        %2031 = vmatpush2.msra.mxu0 0.0
        %2032 = vmatprep.subr.mxu0 0.0
        %2033 = vmatpush2.msra.mxu0 0.0
        %2034 = vmatprep.subr.mxu0 0.0
        %2035 = vmatpush2.msra.mxu0 0.0
        %2036 = vmatprep.subr.mxu0 0.0
        %2037 = vmatpush2.msra.mxu0 0.0
        %2038 = vmatprep.subr.mxu0 0.0
        %2039 = vmatpush2.msra.mxu0 0.0
        %2040 = vmatprep.subr.mxu0 0.0
        %2041 = vmatpush2.msra.mxu0 0.0
        %2042 = vmatprep.subr.mxu0 0.0
        %2043 = vmatpush2.msra.mxu0 0.0
        %2044 = vmatprep.subr.mxu0 0.0
        %2045 = vmatpush2.msra.mxu0 0.0
        %2046 = vmatprep.subr.mxu0 0.0
        %2047 = vmatpush2.msra.mxu0 0.0
        %2048 = vmatprep.mubr.f32.mxu0 0.0
        %2049 = vmatmul.mubr.f32.gmra.mxu0 %v1982
        %v2050 = vpop.f32.mrf.mxu0
        %v2051 = vadd.f32 0.0, %v2050
        %v2052 = vpop.f32.mrf.mxu0
        %2053 = vdwg.mxu0
        %v2055 = vsel %vm1819, %v1902, 0
        %2057 = vmatprep.subr.mxu0 0.0
        %2058 = vmatpush1.msra.mxu0 0.0
        %2059 = vmatprep.subr.mxu0 0.0
        %2060 = vmatpush1.msra.mxu0 0.0
        %2061 = vmatprep.subr.mxu0 0.0
        %2062 = vmatpush1.msra.mxu0 0.0
        %2063 = vmatprep.subr.mxu0 0.0
        %2064 = vmatpush1.msra.mxu0 0.0
        %2065 = vmatprep.subr.mxu0 0.0
        %2066 = vmatpush1.msra.mxu0 0.0
        %2067 = vmatprep.subr.mxu0 0.0
        %2068 = vmatpush1.msra.mxu0 0.0
        %2069 = vmatprep.subr.mxu0 0.0
        %2070 = vmatpush1.msra.mxu0 0.0
        %2071 = vmatprep.subr.mxu0 0.0
        %2072 = vmatpush1.msra.mxu0 0.0
        %2073 = vmatprep.subr.mxu0 0.0
        %2074 = vmatpush1.msra.mxu0 0.0
        %2075 = vmatprep.subr.mxu0 0.0
        %2076 = vmatpush1.msra.mxu0 0.0
        %2077 = vmatprep.subr.mxu0 0.0
        %2078 = vmatpush1.msra.mxu0 0.0
        %2079 = vmatprep.subr.mxu0 0.0
        %2080 = vmatpush1.msra.mxu0 0.0
        %2081 = vmatprep.subr.mxu0 0.0
        %2082 = vmatpush1.msra.mxu0 0.0
        %2083 = vmatprep.subr.mxu0 0.0
        %2084 = vmatpush1.msra.mxu0 0.0
        %2085 = vmatprep.subr.mxu0 0.0
        %2086 = vmatpush1.msra.mxu0 0.0
        %2087 = vmatprep.subr.mxu0 0.0
        %2088 = vmatpush1.msra.mxu0 %v1052
        %2089 = vmatprep.subr.mxu0 0.0
        %2090 = vmatpush2.msra.mxu0 0.0
        %2091 = vmatprep.subr.mxu0 0.0
        %2092 = vmatpush2.msra.mxu0 0.0
        %2093 = vmatprep.subr.mxu0 0.0
        %2094 = vmatpush2.msra.mxu0 0.0
        %2095 = vmatprep.subr.mxu0 0.0
        %2096 = vmatpush2.msra.mxu0 0.0
        %2097 = vmatprep.subr.mxu0 0.0
        %2098 = vmatpush2.msra.mxu0 0.0
        %2099 = vmatprep.subr.mxu0 0.0
        %2100 = vmatpush2.msra.mxu0 0.0
        %2101 = vmatprep.subr.mxu0 0.0
        %2102 = vmatpush2.msra.mxu0 0.0
        %2103 = vmatprep.subr.mxu0 0.0
        %2104 = vmatpush2.msra.mxu0 0.0
        %2105 = vmatprep.subr.mxu0 0.0
        %2106 = vmatpush2.msra.mxu0 0.0
        %2107 = vmatprep.subr.mxu0 0.0
        %2108 = vmatpush2.msra.mxu0 0.0
        %2109 = vmatprep.subr.mxu0 0.0
        %2110 = vmatpush2.msra.mxu0 0.0
        %2111 = vmatprep.subr.mxu0 0.0
        %2112 = vmatpush2.msra.mxu0 0.0
        %2113 = vmatprep.subr.mxu0 0.0
        %2114 = vmatpush2.msra.mxu0 0.0
        %2115 = vmatprep.subr.mxu0 0.0
        %2116 = vmatpush2.msra.mxu0 0.0
        %2117 = vmatprep.subr.mxu0 0.0
        %2118 = vmatpush2.msra.mxu0 0.0
        %2119 = vmatprep.subr.mxu0 0.0
        %2120 = vmatpush2.msra.mxu0 0.0
        %2121 = vmatprep.mubr.f32.mxu0 0.0
        %2122 = vmatmul.mubr.f32.gmra.mxu0 %v2055
        %v2123 = vpop.f32.mrf.mxu0
        %v2124 = vadd.f32 0.0, %v2123
        %v2125 = vpop.f32.mrf.mxu0
        %2126 = vdwg.mxu0
        %v2128 = vsel %vm1819, %v1903, 0
        %2130 = vmatprep.subr.mxu0 0.0
        %2131 = vmatpush1.msra.mxu0 0.0
        %2132 = vmatprep.subr.mxu0 0.0
        %2133 = vmatpush1.msra.mxu0 0.0
        %2134 = vmatprep.subr.mxu0 0.0
        %2135 = vmatpush1.msra.mxu0 0.0
        %2136 = vmatprep.subr.mxu0 0.0
        %2137 = vmatpush1.msra.mxu0 0.0
        %2138 = vmatprep.subr.mxu0 0.0
        %2139 = vmatpush1.msra.mxu0 0.0
        %2140 = vmatprep.subr.mxu0 0.0
        %2141 = vmatpush1.msra.mxu0 0.0
        %2142 = vmatprep.subr.mxu0 0.0
        %2143 = vmatpush1.msra.mxu0 0.0
        %2144 = vmatprep.subr.mxu0 0.0
        %2145 = vmatpush1.msra.mxu0 0.0
        %2146 = vmatprep.subr.mxu0 0.0
        %2147 = vmatpush1.msra.mxu0 0.0
        %2148 = vmatprep.subr.mxu0 0.0
        %2149 = vmatpush1.msra.mxu0 0.0
        %2150 = vmatprep.subr.mxu0 0.0
        %2151 = vmatpush1.msra.mxu0 0.0
        %2152 = vmatprep.subr.mxu0 0.0
        %2153 = vmatpush1.msra.mxu0 0.0
        %2154 = vmatprep.subr.mxu0 0.0
        %2155 = vmatpush1.msra.mxu0 0.0
        %2156 = vmatprep.subr.mxu0 0.0
        %2157 = vmatpush1.msra.mxu0 0.0
        %2158 = vmatprep.subr.mxu0 0.0
        %2159 = vmatpush1.msra.mxu0 0.0
        %2160 = vmatprep.subr.mxu0 0.0
        %2161 = vmatpush1.msra.mxu0 %v1057
        %2162 = vmatprep.subr.mxu0 0.0
        %2163 = vmatpush2.msra.mxu0 0.0
        %2164 = vmatprep.subr.mxu0 0.0
        %2165 = vmatpush2.msra.mxu0 0.0
        %2166 = vmatprep.subr.mxu0 0.0
        %2167 = vmatpush2.msra.mxu0 0.0
        %2168 = vmatprep.subr.mxu0 0.0
        %2169 = vmatpush2.msra.mxu0 0.0
        %2170 = vmatprep.subr.mxu0 0.0
        %2171 = vmatpush2.msra.mxu0 0.0
        %2172 = vmatprep.subr.mxu0 0.0
        %2173 = vmatpush2.msra.mxu0 0.0
        %2174 = vmatprep.subr.mxu0 0.0
        %2175 = vmatpush2.msra.mxu0 0.0
        %2176 = vmatprep.subr.mxu0 0.0
        %2177 = vmatpush2.msra.mxu0 0.0
        %2178 = vmatprep.subr.mxu0 0.0
        %2179 = vmatpush2.msra.mxu0 0.0
        %2180 = vmatprep.subr.mxu0 0.0
        %2181 = vmatpush2.msra.mxu0 0.0
        %2182 = vmatprep.subr.mxu0 0.0
        %2183 = vmatpush2.msra.mxu0 0.0
        %2184 = vmatprep.subr.mxu0 0.0
        %2185 = vmatpush2.msra.mxu0 0.0
        %2186 = vmatprep.subr.mxu0 0.0
        %2187 = vmatpush2.msra.mxu0 0.0
        %2188 = vmatprep.subr.mxu0 0.0
        %2189 = vmatpush2.msra.mxu0 0.0
        %2190 = vmatprep.subr.mxu0 0.0
        %2191 = vmatpush2.msra.mxu0 0.0
        %2192 = vmatprep.subr.mxu0 0.0
        %2193 = vmatpush2.msra.mxu0 0.0
        %2194 = vmatprep.mubr.f32.mxu0 0.0
        %2195 = vmatmul.mubr.f32.gmra.mxu0 %v2128
        %v2196 = vpop.f32.mrf.mxu0
        %v2197 = vadd.f32 0.0, %v2196
        %v2198 = vpop.f32.mrf.mxu0
        %2199 = vdwg.mxu0
        %v2201 = vsel %vm1819, %v1904, 0
        %2203 = vmatprep.subr.mxu0 0.0
        %2204 = vmatpush1.msra.mxu0 0.0
        %2205 = vmatprep.subr.mxu0 0.0
        %2206 = vmatpush1.msra.mxu0 0.0
        %2207 = vmatprep.subr.mxu0 0.0
        %2208 = vmatpush1.msra.mxu0 0.0
        %2209 = vmatprep.subr.mxu0 0.0
        %2210 = vmatpush1.msra.mxu0 0.0
        %2211 = vmatprep.subr.mxu0 0.0
        %2212 = vmatpush1.msra.mxu0 0.0
        %2213 = vmatprep.subr.mxu0 0.0
        %2214 = vmatpush1.msra.mxu0 0.0
        %2215 = vmatprep.subr.mxu0 0.0
        %2216 = vmatpush1.msra.mxu0 0.0
        %2217 = vmatprep.subr.mxu0 0.0
        %2218 = vmatpush1.msra.mxu0 0.0
        %2219 = vmatprep.subr.mxu0 0.0
        %2220 = vmatpush1.msra.mxu0 0.0
        %2221 = vmatprep.subr.mxu0 0.0
        %2222 = vmatpush1.msra.mxu0 0.0
        %2223 = vmatprep.subr.mxu0 0.0
        %2224 = vmatpush1.msra.mxu0 0.0
        %2225 = vmatprep.subr.mxu0 0.0
        %2226 = vmatpush1.msra.mxu0 0.0
        %2227 = vmatprep.subr.mxu0 0.0
        %2228 = vmatpush1.msra.mxu0 0.0
        %2229 = vmatprep.subr.mxu0 0.0
        %2230 = vmatpush1.msra.mxu0 0.0
        %2231 = vmatprep.subr.mxu0 0.0
        %2232 = vmatpush1.msra.mxu0 0.0
        %2233 = vmatprep.subr.mxu0 0.0
        %2234 = vmatpush1.msra.mxu0 %v1127
        %2235 = vmatprep.subr.mxu0 0.0
        %2236 = vmatpush2.msra.mxu0 0.0
        %2237 = vmatprep.subr.mxu0 0.0
        %2238 = vmatpush2.msra.mxu0 0.0
        %2239 = vmatprep.subr.mxu0 0.0
        %2240 = vmatpush2.msra.mxu0 0.0
        %2241 = vmatprep.subr.mxu0 0.0
        %2242 = vmatpush2.msra.mxu0 0.0
        %2243 = vmatprep.subr.mxu0 0.0
        %2244 = vmatpush2.msra.mxu0 0.0
        %2245 = vmatprep.subr.mxu0 0.0
        %2246 = vmatpush2.msra.mxu0 0.0
        %2247 = vmatprep.subr.mxu0 0.0
        %2248 = vmatpush2.msra.mxu0 0.0
        %2249 = vmatprep.subr.mxu0 0.0
        %2250 = vmatpush2.msra.mxu0 0.0
        %2251 = vmatprep.subr.mxu0 0.0
        %2252 = vmatpush2.msra.mxu0 0.0
        %2253 = vmatprep.subr.mxu0 0.0
        %2254 = vmatpush2.msra.mxu0 0.0
        %2255 = vmatprep.subr.mxu0 0.0
        %2256 = vmatpush2.msra.mxu0 0.0
        %2257 = vmatprep.subr.mxu0 0.0
        %2258 = vmatpush2.msra.mxu0 0.0
        %2259 = vmatprep.subr.mxu0 0.0
        %2260 = vmatpush2.msra.mxu0 0.0
        %2261 = vmatprep.subr.mxu0 0.0
        %2262 = vmatpush2.msra.mxu0 0.0
        %2263 = vmatprep.subr.mxu0 0.0
        %2264 = vmatpush2.msra.mxu0 0.0
        %2265 = vmatprep.subr.mxu0 0.0
        %2266 = vmatpush2.msra.mxu0 0.0
        %2267 = vmatprep.mubr.f32.mxu0 0.0
        %2268 = vmatmul.mubr.f32.gmra.mxu0 %v2201
        %v2269 = vpop.f32.mrf.mxu0
        %v2270 = vadd.f32 0.0, %v2269
        %v2271 = vpop.f32.mrf.mxu0
        %2272 = vdwg.mxu0
        %v2274 = vsel %vm1819, %v1905, 0
        %2276 = vmatprep.subr.mxu0 0.0
        %2277 = vmatpush1.msra.mxu0 0.0
        %2278 = vmatprep.subr.mxu0 0.0
        %2279 = vmatpush1.msra.mxu0 0.0
        %2280 = vmatprep.subr.mxu0 0.0
        %2281 = vmatpush1.msra.mxu0 0.0
        %2282 = vmatprep.subr.mxu0 0.0
        %2283 = vmatpush1.msra.mxu0 0.0
        %2284 = vmatprep.subr.mxu0 0.0
        %2285 = vmatpush1.msra.mxu0 0.0
        %2286 = vmatprep.subr.mxu0 0.0
        %2287 = vmatpush1.msra.mxu0 0.0
        %2288 = vmatprep.subr.mxu0 0.0
        %2289 = vmatpush1.msra.mxu0 0.0
        %2290 = vmatprep.subr.mxu0 0.0
        %2291 = vmatpush1.msra.mxu0 0.0
        %2292 = vmatprep.subr.mxu0 0.0
        %2293 = vmatpush1.msra.mxu0 0.0
        %2294 = vmatprep.subr.mxu0 0.0
        %2295 = vmatpush1.msra.mxu0 0.0
        %2296 = vmatprep.subr.mxu0 0.0
        %2297 = vmatpush1.msra.mxu0 0.0
        %2298 = vmatprep.subr.mxu0 0.0
        %2299 = vmatpush1.msra.mxu0 0.0
        %2300 = vmatprep.subr.mxu0 0.0
        %2301 = vmatpush1.msra.mxu0 0.0
        %2302 = vmatprep.subr.mxu0 0.0
        %2303 = vmatpush1.msra.mxu0 0.0
        %2304 = vmatprep.subr.mxu0 0.0
        %2305 = vmatpush1.msra.mxu0 0.0
        %2306 = vmatprep.subr.mxu0 0.0
        %2307 = vmatpush1.msra.mxu0 %v1132
        %2308 = vmatprep.subr.mxu0 0.0
        %2309 = vmatpush2.msra.mxu0 0.0
        %2310 = vmatprep.subr.mxu0 0.0
        %2311 = vmatpush2.msra.mxu0 0.0
        %2312 = vmatprep.subr.mxu0 0.0
        %2313 = vmatpush2.msra.mxu0 0.0
        %2314 = vmatprep.subr.mxu0 0.0
        %2315 = vmatpush2.msra.mxu0 0.0
        %2316 = vmatprep.subr.mxu0 0.0
        %2317 = vmatpush2.msra.mxu0 0.0
        %2318 = vmatprep.subr.mxu0 0.0
        %2319 = vmatpush2.msra.mxu0 0.0
        %2320 = vmatprep.subr.mxu0 0.0
        %2321 = vmatpush2.msra.mxu0 0.0
        %2322 = vmatprep.subr.mxu0 0.0
        %2323 = vmatpush2.msra.mxu0 0.0
        %2324 = vmatprep.subr.mxu0 0.0
        %2325 = vmatpush2.msra.mxu0 0.0
        %2326 = vmatprep.subr.mxu0 0.0
        %2327 = vmatpush2.msra.mxu0 0.0
        %2328 = vmatprep.subr.mxu0 0.0
        %2329 = vmatpush2.msra.mxu0 0.0
        %2330 = vmatprep.subr.mxu0 0.0
        %2331 = vmatpush2.msra.mxu0 0.0
        %2332 = vmatprep.subr.mxu0 0.0
        %2333 = vmatpush2.msra.mxu0 0.0
        %2334 = vmatprep.subr.mxu0 0.0
        %2335 = vmatpush2.msra.mxu0 0.0
        %2336 = vmatprep.subr.mxu0 0.0
        %2337 = vmatpush2.msra.mxu0 0.0
        %2338 = vmatprep.subr.mxu0 0.0
        %2339 = vmatpush2.msra.mxu0 0.0
        %2340 = vmatprep.mubr.f32.mxu0 0.0
        %2341 = vmatmul.mubr.f32.gmra.mxu0 %v2274
        %v2342 = vpop.f32.mrf.mxu0
        %v2343 = vadd.f32 0.0, %v2342
        %v2344 = vpop.f32.mrf.mxu0
        %2345 = vdwg.mxu0
        %v2347 = vsel %vm1819, %v1906, 0
        %2349 = vmatprep.subr.mxu0 0.0
        %2350 = vmatpush1.msra.mxu0 0.0
        %2351 = vmatprep.subr.mxu0 0.0
        %2352 = vmatpush1.msra.mxu0 0.0
        %2353 = vmatprep.subr.mxu0 0.0
        %2354 = vmatpush1.msra.mxu0 0.0
        %2355 = vmatprep.subr.mxu0 0.0
        %2356 = vmatpush1.msra.mxu0 0.0
        %2357 = vmatprep.subr.mxu0 0.0
        %2358 = vmatpush1.msra.mxu0 0.0
        %2359 = vmatprep.subr.mxu0 0.0
        %2360 = vmatpush1.msra.mxu0 0.0
        %2361 = vmatprep.subr.mxu0 0.0
        %2362 = vmatpush1.msra.mxu0 0.0
        %2363 = vmatprep.subr.mxu0 0.0
        %2364 = vmatpush1.msra.mxu0 0.0
        %2365 = vmatprep.subr.mxu0 0.0
        %2366 = vmatpush1.msra.mxu0 0.0
        %2367 = vmatprep.subr.mxu0 0.0
        %2368 = vmatpush1.msra.mxu0 0.0
        %2369 = vmatprep.subr.mxu0 0.0
        %2370 = vmatpush1.msra.mxu0 0.0
        %2371 = vmatprep.subr.mxu0 0.0
        %2372 = vmatpush1.msra.mxu0 0.0
        %2373 = vmatprep.subr.mxu0 0.0
        %2374 = vmatpush1.msra.mxu0 0.0
        %2375 = vmatprep.subr.mxu0 0.0
        %2376 = vmatpush1.msra.mxu0 0.0
        %2377 = vmatprep.subr.mxu0 0.0
        %2378 = vmatpush1.msra.mxu0 0.0
        %2379 = vmatprep.subr.mxu0 0.0
        %2380 = vmatpush1.msra.mxu0 %v1202
        %2381 = vmatprep.subr.mxu0 0.0
        %2382 = vmatpush2.msra.mxu0 0.0
        %2383 = vmatprep.subr.mxu0 0.0
        %2384 = vmatpush2.msra.mxu0 0.0
        %2385 = vmatprep.subr.mxu0 0.0
        %2386 = vmatpush2.msra.mxu0 0.0
        %2387 = vmatprep.subr.mxu0 0.0
        %2388 = vmatpush2.msra.mxu0 0.0
        %2389 = vmatprep.subr.mxu0 0.0
        %2390 = vmatpush2.msra.mxu0 0.0
        %2391 = vmatprep.subr.mxu0 0.0
        %2392 = vmatpush2.msra.mxu0 0.0
        %2393 = vmatprep.subr.mxu0 0.0
        %2394 = vmatpush2.msra.mxu0 0.0
        %2395 = vmatprep.subr.mxu0 0.0
        %2396 = vmatpush2.msra.mxu0 0.0
        %2397 = vmatprep.subr.mxu0 0.0
        %2398 = vmatpush2.msra.mxu0 0.0
        %2399 = vmatprep.subr.mxu0 0.0
        %2400 = vmatpush2.msra.mxu0 0.0
        %2401 = vmatprep.subr.mxu0 0.0
        %2402 = vmatpush2.msra.mxu0 0.0
        %2403 = vmatprep.subr.mxu0 0.0
        %2404 = vmatpush2.msra.mxu0 0.0
        %2405 = vmatprep.subr.mxu0 0.0
        %2406 = vmatpush2.msra.mxu0 0.0
        %2407 = vmatprep.subr.mxu0 0.0
        %2408 = vmatpush2.msra.mxu0 0.0
        %2409 = vmatprep.subr.mxu0 0.0
        %2410 = vmatpush2.msra.mxu0 0.0
        %2411 = vmatprep.subr.mxu0 0.0
        %2412 = vmatpush2.msra.mxu0 0.0
        %2413 = vmatprep.mubr.f32.mxu0 0.0
        %2414 = vmatmul.mubr.f32.gmra.mxu0 %v2347
        %v2415 = vpop.f32.mrf.mxu0
        %v2416 = vadd.f32 0.0, %v2415
        %v2417 = vpop.f32.mrf.mxu0
        %2418 = vdwg.mxu0
        %v2420 = vsel %vm1819, %v1907, 0
        %2422 = vmatprep.subr.mxu0 0.0
        %2423 = vmatpush1.msra.mxu0 0.0
        %2424 = vmatprep.subr.mxu0 0.0
        %2425 = vmatpush1.msra.mxu0 0.0
        %2426 = vmatprep.subr.mxu0 0.0
        %2427 = vmatpush1.msra.mxu0 0.0
        %2428 = vmatprep.subr.mxu0 0.0
        %2429 = vmatpush1.msra.mxu0 0.0
        %2430 = vmatprep.subr.mxu0 0.0
        %2431 = vmatpush1.msra.mxu0 0.0
        %2432 = vmatprep.subr.mxu0 0.0
        %2433 = vmatpush1.msra.mxu0 0.0
        %2434 = vmatprep.subr.mxu0 0.0
        %2435 = vmatpush1.msra.mxu0 0.0
        %2436 = vmatprep.subr.mxu0 0.0
        %2437 = vmatpush1.msra.mxu0 0.0
        %2438 = vmatprep.subr.mxu0 0.0
        %2439 = vmatpush1.msra.mxu0 0.0
        %2440 = vmatprep.subr.mxu0 0.0
        %2441 = vmatpush1.msra.mxu0 0.0
        %2442 = vmatprep.subr.mxu0 0.0
        %2443 = vmatpush1.msra.mxu0 0.0
        %2444 = vmatprep.subr.mxu0 0.0
        %2445 = vmatpush1.msra.mxu0 0.0
        %2446 = vmatprep.subr.mxu0 0.0
        %2447 = vmatpush1.msra.mxu0 0.0
        %2448 = vmatprep.subr.mxu0 0.0
        %2449 = vmatpush1.msra.mxu0 0.0
        %2450 = vmatprep.subr.mxu0 0.0
        %2451 = vmatpush1.msra.mxu0 0.0
        %2452 = vmatprep.subr.mxu0 0.0
        %2453 = vmatpush1.msra.mxu0 %v1207
        %2454 = vmatprep.subr.mxu0 0.0
        %2455 = vmatpush2.msra.mxu0 0.0
        %2456 = vmatprep.subr.mxu0 0.0
        %2457 = vmatpush2.msra.mxu0 0.0
        %2458 = vmatprep.subr.mxu0 0.0
        %2459 = vmatpush2.msra.mxu0 0.0
        %2460 = vmatprep.subr.mxu0 0.0
        %2461 = vmatpush2.msra.mxu0 0.0
        %2462 = vmatprep.subr.mxu0 0.0
        %2463 = vmatpush2.msra.mxu0 0.0
        %2464 = vmatprep.subr.mxu0 0.0
        %2465 = vmatpush2.msra.mxu0 0.0
        %2466 = vmatprep.subr.mxu0 0.0
        %2467 = vmatpush2.msra.mxu0 0.0
        %2468 = vmatprep.subr.mxu0 0.0
        %2469 = vmatpush2.msra.mxu0 0.0
        %2470 = vmatprep.subr.mxu0 0.0
        %2471 = vmatpush2.msra.mxu0 0.0
        %2472 = vmatprep.subr.mxu0 0.0
        %2473 = vmatpush2.msra.mxu0 0.0
        %2474 = vmatprep.subr.mxu0 0.0
        %2475 = vmatpush2.msra.mxu0 0.0
        %2476 = vmatprep.subr.mxu0 0.0
        %2477 = vmatpush2.msra.mxu0 0.0
        %2478 = vmatprep.subr.mxu0 0.0
        %2479 = vmatpush2.msra.mxu0 0.0
        %2480 = vmatprep.subr.mxu0 0.0
        %2481 = vmatpush2.msra.mxu0 0.0
        %2482 = vmatprep.subr.mxu0 0.0
        %2483 = vmatpush2.msra.mxu0 0.0
        %2484 = vmatprep.subr.mxu0 0.0
        %2485 = vmatpush2.msra.mxu0 0.0
        %2486 = vmatprep.mubr.f32.mxu0 0.0
        %2487 = vmatmul.mubr.f32.gmra.mxu0 %v2420
        %v2488 = vpop.f32.mrf.mxu0
        %v2489 = vadd.f32 0.0, %v2488
        %v2490 = vpop.f32.mrf.mxu0
        %2491 = vdwg.mxu0
        %v2492 = vld [vmem:[%s4] sm:$0xff]
        %v2493 = vld [vmem:[%s4 + $0x8] sm:$0xff]
        %v2494 = vld [vmem:[%s4 + $0x10] sm:$0xff]
        %v2495 = vld [vmem:[%s4 + $0x18] sm:$0xff]
        %v2496 = vld [vmem:[%s4 + $0x20] sm:$0xff]
        %v2497 = vld [vmem:[%s4 + $0x28] sm:$0xff]
        %v2498 = vld [vmem:[%s4 + $0x30] sm:$0xff]
        %v2499 = vld [vmem:[%s4 + $0x38] sm:$0xff]
        %v2501 = vsel %vm1210, %v1978, 0
        %v2504 = vsel %vm1210, %v2051, 0
        %2506 = vmatprep.subr.mxu0 0.0
        %2507 = vmatpush1.msra.mxu0 0.0
        %2508 = vmatprep.subr.mxu0 0.0
        %2509 = vmatpush1.msra.mxu0 0.0
        %2510 = vmatprep.subr.mxu0 0.0
        %2511 = vmatpush1.msra.mxu0 0.0
        %2512 = vmatprep.subr.mxu0 0.0
        %2513 = vmatpush1.msra.mxu0 0.0
        %2514 = vmatprep.subr.mxu0 0.0
        %2515 = vmatpush1.msra.mxu0 0.0
        %2516 = vmatprep.subr.mxu0 0.0
        %2517 = vmatpush1.msra.mxu0 0.0
        %2518 = vmatprep.subr.mxu0 0.0
        %2519 = vmatpush1.msra.mxu0 0.0
        %2520 = vmatprep.subr.mxu0 0.0
        %2521 = vmatpush1.msra.mxu0 0.0
        %2522 = vmatprep.subr.mxu0 0.0
        %2523 = vmatpush1.msra.mxu0 0.0
        %2524 = vmatprep.subr.mxu0 0.0
        %2525 = vmatpush1.msra.mxu0 0.0
        %2526 = vmatprep.subr.mxu0 0.0
        %2527 = vmatpush1.msra.mxu0 0.0
        %2528 = vmatprep.subr.mxu0 0.0
        %2529 = vmatpush1.msra.mxu0 0.0
        %2530 = vmatprep.subr.mxu0 0.0
        %2531 = vmatpush1.msra.mxu0 0.0
        %2532 = vmatprep.subr.mxu0 0.0
        %2533 = vmatpush1.msra.mxu0 0.0
        %2534 = vmatprep.subr.mxu0 0.0
        %2535 = vmatpush1.msra.mxu0 %v2493
        %2536 = vmatprep.subr.mxu0 0.0
        %2537 = vmatpush1.msra.mxu0 %v2492
        %2538 = vmatprep.subr.mxu0 0.0
        %2539 = vmatpush2.msra.mxu0 0.0
        %2540 = vmatprep.subr.mxu0 0.0
        %2541 = vmatpush2.msra.mxu0 0.0
        %2542 = vmatprep.subr.mxu0 0.0
        %2543 = vmatpush2.msra.mxu0 0.0
        %2544 = vmatprep.subr.mxu0 0.0
        %2545 = vmatpush2.msra.mxu0 0.0
        %2546 = vmatprep.subr.mxu0 0.0
        %2547 = vmatpush2.msra.mxu0 0.0
        %2548 = vmatprep.subr.mxu0 0.0
        %2549 = vmatpush2.msra.mxu0 0.0
        %2550 = vmatprep.subr.mxu0 0.0
        %2551 = vmatpush2.msra.mxu0 0.0
        %2552 = vmatprep.subr.mxu0 0.0
        %2553 = vmatpush2.msra.mxu0 0.0
        %2554 = vmatprep.subr.mxu0 0.0
        %2555 = vmatpush2.msra.mxu0 0.0
        %2556 = vmatprep.subr.mxu0 0.0
        %2557 = vmatpush2.msra.mxu0 0.0
        %2558 = vmatprep.subr.mxu0 0.0
        %2559 = vmatpush2.msra.mxu0 0.0
        %2560 = vmatprep.subr.mxu0 0.0
        %2561 = vmatpush2.msra.mxu0 0.0
        %2562 = vmatprep.subr.mxu0 0.0
        %2563 = vmatpush2.msra.mxu0 0.0
        %2564 = vmatprep.subr.mxu0 0.0
        %2565 = vmatpush2.msra.mxu0 0.0
        %2566 = vmatprep.subr.mxu0 0.0
        %2567 = vmatpush2.msra.mxu0 0.0
        %2568 = vmatprep.subr.mxu0 0.0
        %2569 = vmatpush2.msra.mxu0 0.0
        %2570 = vmatprep.mubr.f32.mxu0 0.0
        %2571 = vmatmul.mubr.f32.gmra.mxu0 %v2501
        %v2572 = vpop.f32.mrf.mxu0
        %v2573 = vadd.f32 0.0, %v2572
        %v2574 = vpop.f32.mrf.mxu0
        %2575 = vmatprep.mubr.f32.mxu0 0.0
        %2576 = vmatmul.mubr.f32.gmra.mxu0 %v2504
        %v2577 = vpop.f32.mrf.mxu0
        %v2578 = vadd.f32 0.0, %v2577
        %v2579 = vpop.f32.mrf.mxu0
        %2580 = vdwg.mxu0
        %v2582 = vsel %vm1210, %v2124, 0
        %v2585 = vsel %vm1210, %v2197, 0
        %2587 = vmatprep.subr.mxu0 0.0
        %2588 = vmatpush1.msra.mxu0 0.0
        %2589 = vmatprep.subr.mxu0 0.0
        %2590 = vmatpush1.msra.mxu0 0.0
        %2591 = vmatprep.subr.mxu0 0.0
        %2592 = vmatpush1.msra.mxu0 0.0
        %2593 = vmatprep.subr.mxu0 0.0
        %2594 = vmatpush1.msra.mxu0 0.0
        %2595 = vmatprep.subr.mxu0 0.0
        %2596 = vmatpush1.msra.mxu0 0.0
        %2597 = vmatprep.subr.mxu0 0.0
        %2598 = vmatpush1.msra.mxu0 0.0
        %2599 = vmatprep.subr.mxu0 0.0
        %2600 = vmatpush1.msra.mxu0 0.0
        %2601 = vmatprep.subr.mxu0 0.0
        %2602 = vmatpush1.msra.mxu0 0.0
        %2603 = vmatprep.subr.mxu0 0.0
        %2604 = vmatpush1.msra.mxu0 0.0
        %2605 = vmatprep.subr.mxu0 0.0
        %2606 = vmatpush1.msra.mxu0 0.0
        %2607 = vmatprep.subr.mxu0 0.0
        %2608 = vmatpush1.msra.mxu0 0.0
        %2609 = vmatprep.subr.mxu0 0.0
        %2610 = vmatpush1.msra.mxu0 0.0
        %2611 = vmatprep.subr.mxu0 0.0
        %2612 = vmatpush1.msra.mxu0 0.0
        %2613 = vmatprep.subr.mxu0 0.0
        %2614 = vmatpush1.msra.mxu0 0.0
        %2615 = vmatprep.subr.mxu0 0.0
        %2616 = vmatpush1.msra.mxu0 %v2495
        %2617 = vmatprep.subr.mxu0 0.0
        %2618 = vmatpush1.msra.mxu0 %v2494
        %2619 = vmatprep.subr.mxu0 0.0
        %2620 = vmatpush2.msra.mxu0 0.0
        %2621 = vmatprep.subr.mxu0 0.0
        %2622 = vmatpush2.msra.mxu0 0.0
        %2623 = vmatprep.subr.mxu0 0.0
        %2624 = vmatpush2.msra.mxu0 0.0
        %2625 = vmatprep.subr.mxu0 0.0
        %2626 = vmatpush2.msra.mxu0 0.0
        %2627 = vmatprep.subr.mxu0 0.0
        %2628 = vmatpush2.msra.mxu0 0.0
        %2629 = vmatprep.subr.mxu0 0.0
        %2630 = vmatpush2.msra.mxu0 0.0
        %2631 = vmatprep.subr.mxu0 0.0
        %2632 = vmatpush2.msra.mxu0 0.0
        %2633 = vmatprep.subr.mxu0 0.0
        %2634 = vmatpush2.msra.mxu0 0.0
        %2635 = vmatprep.subr.mxu0 0.0
        %2636 = vmatpush2.msra.mxu0 0.0
        %2637 = vmatprep.subr.mxu0 0.0
        %2638 = vmatpush2.msra.mxu0 0.0
        %2639 = vmatprep.subr.mxu0 0.0
        %2640 = vmatpush2.msra.mxu0 0.0
        %2641 = vmatprep.subr.mxu0 0.0
        %2642 = vmatpush2.msra.mxu0 0.0
        %2643 = vmatprep.subr.mxu0 0.0
        %2644 = vmatpush2.msra.mxu0 0.0
        %2645 = vmatprep.subr.mxu0 0.0
        %2646 = vmatpush2.msra.mxu0 0.0
        %2647 = vmatprep.subr.mxu0 0.0
        %2648 = vmatpush2.msra.mxu0 0.0
        %2649 = vmatprep.subr.mxu0 0.0
        %2650 = vmatpush2.msra.mxu0 0.0
        %2651 = vmatprep.mubr.f32.mxu0 0.0
        %2652 = vmatmul.mubr.f32.gmra.mxu0 %v2582
        %v2653 = vpop.f32.mrf.mxu0
        %v2654 = vadd.f32 0.0, %v2653
        %v2655 = vpop.f32.mrf.mxu0
        %2656 = vmatprep.mubr.f32.mxu0 0.0
        %2657 = vmatmul.mubr.f32.gmra.mxu0 %v2585
        %v2658 = vpop.f32.mrf.mxu0
        %v2659 = vadd.f32 0.0, %v2658
        %v2660 = vpop.f32.mrf.mxu0
        %2661 = vdwg.mxu0
        %v2663 = vsel %vm1210, %v2270, 0
        %v2666 = vsel %vm1210, %v2343, 0
        %2668 = vmatprep.subr.mxu0 0.0
        %2669 = vmatpush1.msra.mxu0 0.0
        %2670 = vmatprep.subr.mxu0 0.0
        %2671 = vmatpush1.msra.mxu0 0.0
        %2672 = vmatprep.subr.mxu0 0.0
        %2673 = vmatpush1.msra.mxu0 0.0
        %2674 = vmatprep.subr.mxu0 0.0
        %2675 = vmatpush1.msra.mxu0 0.0
        %2676 = vmatprep.subr.mxu0 0.0
        %2677 = vmatpush1.msra.mxu0 0.0
        %2678 = vmatprep.subr.mxu0 0.0
        %2679 = vmatpush1.msra.mxu0 0.0
        %2680 = vmatprep.subr.mxu0 0.0
        %2681 = vmatpush1.msra.mxu0 0.0
        %2682 = vmatprep.subr.mxu0 0.0
        %2683 = vmatpush1.msra.mxu0 0.0
        %2684 = vmatprep.subr.mxu0 0.0
        %2685 = vmatpush1.msra.mxu0 0.0
        %2686 = vmatprep.subr.mxu0 0.0
        %2687 = vmatpush1.msra.mxu0 0.0
        %2688 = vmatprep.subr.mxu0 0.0
        %2689 = vmatpush1.msra.mxu0 0.0
        %2690 = vmatprep.subr.mxu0 0.0
        %2691 = vmatpush1.msra.mxu0 0.0
        %2692 = vmatprep.subr.mxu0 0.0
        %2693 = vmatpush1.msra.mxu0 0.0
        %2694 = vmatprep.subr.mxu0 0.0
        %2695 = vmatpush1.msra.mxu0 0.0
        %2696 = vmatprep.subr.mxu0 0.0
        %2697 = vmatpush1.msra.mxu0 %v2497
        %2698 = vmatprep.subr.mxu0 0.0
        %2699 = vmatpush1.msra.mxu0 %v2496
        %2700 = vmatprep.subr.mxu0 0.0
        %2701 = vmatpush2.msra.mxu0 0.0
        %2702 = vmatprep.subr.mxu0 0.0
        %2703 = vmatpush2.msra.mxu0 0.0
        %2704 = vmatprep.subr.mxu0 0.0
        %2705 = vmatpush2.msra.mxu0 0.0
        %2706 = vmatprep.subr.mxu0 0.0
        %2707 = vmatpush2.msra.mxu0 0.0
        %2708 = vmatprep.subr.mxu0 0.0
        %2709 = vmatpush2.msra.mxu0 0.0
        %2710 = vmatprep.subr.mxu0 0.0
        %2711 = vmatpush2.msra.mxu0 0.0
        %2712 = vmatprep.subr.mxu0 0.0
        %2713 = vmatpush2.msra.mxu0 0.0
        %2714 = vmatprep.subr.mxu0 0.0
        %2715 = vmatpush2.msra.mxu0 0.0
        %2716 = vmatprep.subr.mxu0 0.0
        %2717 = vmatpush2.msra.mxu0 0.0
        %2718 = vmatprep.subr.mxu0 0.0
        %2719 = vmatpush2.msra.mxu0 0.0
        %2720 = vmatprep.subr.mxu0 0.0
        %2721 = vmatpush2.msra.mxu0 0.0
        %2722 = vmatprep.subr.mxu0 0.0
        %2723 = vmatpush2.msra.mxu0 0.0
        %2724 = vmatprep.subr.mxu0 0.0
        %2725 = vmatpush2.msra.mxu0 0.0
        %2726 = vmatprep.subr.mxu0 0.0
        %2727 = vmatpush2.msra.mxu0 0.0
        %2728 = vmatprep.subr.mxu0 0.0
        %2729 = vmatpush2.msra.mxu0 0.0
        %2730 = vmatprep.subr.mxu0 0.0
        %2731 = vmatpush2.msra.mxu0 0.0
        %2732 = vmatprep.mubr.f32.mxu0 0.0
        %2733 = vmatmul.mubr.f32.gmra.mxu0 %v2663
        %v2734 = vpop.f32.mrf.mxu0
        %v2735 = vadd.f32 0.0, %v2734
        %v2736 = vpop.f32.mrf.mxu0
        %2737 = vmatprep.mubr.f32.mxu0 0.0
        %2738 = vmatmul.mubr.f32.gmra.mxu0 %v2666
        %v2739 = vpop.f32.mrf.mxu0
        %v2740 = vadd.f32 0.0, %v2739
        %v2741 = vpop.f32.mrf.mxu0
        %2742 = vdwg.mxu0
        %v2744 = vsel %vm1210, %v2416, 0
        %v2747 = vsel %vm1210, %v2489, 0
        %2749 = vmatprep.subr.mxu0 0.0
        %2750 = vmatpush1.msra.mxu0 0.0
        %2751 = vmatprep.subr.mxu0 0.0
        %2752 = vmatpush1.msra.mxu0 0.0
        %2753 = vmatprep.subr.mxu0 0.0
        %2754 = vmatpush1.msra.mxu0 0.0
        %2755 = vmatprep.subr.mxu0 0.0
        %2756 = vmatpush1.msra.mxu0 0.0
        %2757 = vmatprep.subr.mxu0 0.0
        %2758 = vmatpush1.msra.mxu0 0.0
        %2759 = vmatprep.subr.mxu0 0.0
        %2760 = vmatpush1.msra.mxu0 0.0
        %2761 = vmatprep.subr.mxu0 0.0
        %2762 = vmatpush1.msra.mxu0 0.0
        %2763 = vmatprep.subr.mxu0 0.0
        %2764 = vmatpush1.msra.mxu0 0.0
        %2765 = vmatprep.subr.mxu0 0.0
        %2766 = vmatpush1.msra.mxu0 0.0
        %2767 = vmatprep.subr.mxu0 0.0
        %2768 = vmatpush1.msra.mxu0 0.0
        %2769 = vmatprep.subr.mxu0 0.0
        %2770 = vmatpush1.msra.mxu0 0.0
        %2771 = vmatprep.subr.mxu0 0.0
        %2772 = vmatpush1.msra.mxu0 0.0
        %2773 = vmatprep.subr.mxu0 0.0
        %2774 = vmatpush1.msra.mxu0 0.0
        %2775 = vmatprep.subr.mxu0 0.0
        %2776 = vmatpush1.msra.mxu0 0.0
        %2777 = vmatprep.subr.mxu0 0.0
        %2778 = vmatpush1.msra.mxu0 %v2499
        %2779 = vmatprep.subr.mxu0 0.0
        %2780 = vmatpush1.msra.mxu0 %v2498
        %2781 = vmatprep.subr.mxu0 0.0
        %2782 = vmatpush2.msra.mxu0 0.0
        %2783 = vmatprep.subr.mxu0 0.0
        %2784 = vmatpush2.msra.mxu0 0.0
        %2785 = vmatprep.subr.mxu0 0.0
        %2786 = vmatpush2.msra.mxu0 0.0
        %2787 = vmatprep.subr.mxu0 0.0
        %2788 = vmatpush2.msra.mxu0 0.0
        %2789 = vmatprep.subr.mxu0 0.0
        %2790 = vmatpush2.msra.mxu0 0.0
        %2791 = vmatprep.subr.mxu0 0.0
        %2792 = vmatpush2.msra.mxu0 0.0
        %2793 = vmatprep.subr.mxu0 0.0
        %2794 = vmatpush2.msra.mxu0 0.0
        %2795 = vmatprep.subr.mxu0 0.0
        %2796 = vmatpush2.msra.mxu0 0.0
        %2797 = vmatprep.subr.mxu0 0.0
        %2798 = vmatpush2.msra.mxu0 0.0
        %2799 = vmatprep.subr.mxu0 0.0
        %2800 = vmatpush2.msra.mxu0 0.0
        %2801 = vmatprep.subr.mxu0 0.0
        %2802 = vmatpush2.msra.mxu0 0.0
        %2803 = vmatprep.subr.mxu0 0.0
        %2804 = vmatpush2.msra.mxu0 0.0
        %2805 = vmatprep.subr.mxu0 0.0
        %2806 = vmatpush2.msra.mxu0 0.0
        %2807 = vmatprep.subr.mxu0 0.0
        %2808 = vmatpush2.msra.mxu0 0.0
        %2809 = vmatprep.subr.mxu0 0.0
        %2810 = vmatpush2.msra.mxu0 0.0
        %2811 = vmatprep.subr.mxu0 0.0
        %2812 = vmatpush2.msra.mxu0 0.0
        %2813 = vmatprep.mubr.f32.mxu0 0.0
        %2814 = vmatmul.mubr.f32.gmra.mxu0 %v2744
        %v2815 = vpop.f32.mrf.mxu0
        %v2816 = vadd.f32 0.0, %v2815
        %v2817 = vpop.f32.mrf.mxu0
        %2818 = vmatprep.mubr.f32.mxu0 0.0
        %2819 = vmatmul.mubr.f32.gmra.mxu0 %v2747
        %v2820 = vpop.f32.mrf.mxu0
        %v2821 = vadd.f32 0.0, %v2820
        %v2822 = vpop.f32.mrf.mxu0
        %2823 = vdwg.mxu0
        %v2824 = vsel %vm271, %v2573, 0.0
        %v2825 = vsel %vm271, %v2654, 0.0
        %v2826 = vadd.f32 %v2824, %v2825
        %v2827 = vsel %vm271, %v2735, 0.0
        %v2828 = vadd.f32 %v2826, %v2827
        %v2829 = vsel %vm271, %v2816, 0.0
        %v2830 = vadd.f32 %v2828, %v2829
        %v2831 = vsel %vm271, %v2578, 0.0
        %v2832 = vsel %vm271, %v2659, 0.0
        %v2833 = vadd.f32 %v2831, %v2832
        %v2834 = vsel %vm271, %v2740, 0.0
        %v2835 = vadd.f32 %v2833, %v2834
        %v2836 = vsel %vm271, %v2821, 0.0
        %v2837 = vadd.f32 %v2835, %v2836
        %v2838 = vld [vmem:[%s5] sm:$0x1]
        %v2840 = vlaneseq
        %v2841 = vshrl.u32 %v2840, 7
        %v2842 = vsub.s32 0, %v2841
        %v2843 = vrot.slane %v2838, %v2842
        %v2845 = vadd.f32 %v2830, %v2843
        %v2846 = vadd.f32 %v2837, %v2843
        %2847 = vst.msk [vmem:[%s245] sm:$0xff] %vm271, %v2845
        %2848 = vst.msk [vmem:[%s245 + $0x8] sm:$0xff] %vm271, %v2846
        %s2849 = sand.u32 %s159, 1
        %s2850 = scalar_lea.sflag [#allocation3], %s2849
        %s2851 = sand.u32 %s159, 1
        %s2852 = smul.addr %s2851, 16
        %s2853 = scalar_lea.vmem [#allocation2], %s2852
        // Predicated region
        $region45: #{tpu_custom_call.1} parent=43 // pred_check
          %p2854 = pneg %p169
        $region46: #{tpu_custom_call.1} parent=43 // pred_check_branch
          %2856 = sbr.rel (%p2854) target = $region48
        $region47: #{tpu_custom_call.1} parent=43 // pred_region
          %s2857 = smul.u32 2, %s20
          %s2859 = ssub.s32 256, 256
          %2860 = vsyncadd %s2850, %s2859
          %s2861 = smul.addr %s2857, 128
          %s2862 = scalar_lea.hbm %s6, %s2861
          %s2863 = sshll.u32 %s2853, 4
          %s2864 = int_to_ptr.vmem [resolvable:$true] %s2863
          %2869 = dma.vmem_to_hbm [thread:$0]  %s2864, 256, %s2862, %s2850, 128, 128, 8
        $region48: #{tpu_custom_call.1} parent=43 // pred_fallthru
          _
      $region44: #{tpu_custom_call.1} parent=5 // pred_fallthru
        _
      %p2870 = scmp.le.s32.totalorder 2, %s15
      // Predicated region
      $region49: #{tpu_custom_call.1} parent=5 // pred_check
        %p2871 = pneg %p2870
      $region50: #{tpu_custom_call.1} parent=5 // pred_check_branch
        %2873 = sbr.rel (%p2871) target = $region52
      $region51: #{tpu_custom_call.1} parent=5 // pred_region
        %s2874 = ssub.s32 %s15, 2
        // Predicated region
        $region53: #{tpu_custom_call.1} parent=51 // pred_check
          %p2875 = pneg %p175
        $region54: #{tpu_custom_call.1} parent=51 // pred_check_branch
          %2877 = sbr.rel (%p2875) target = $region56
        $region55: #{tpu_custom_call.1} parent=51 // pred_region
          %s2878 = sand.u32 %s160, 1
          %s2879 = scalar_lea.sflag [#allocation3], %s2878
          %s2880 = sand.u32 %s160, 1
          %s2881 = smul.addr %s2880, 16
          %s2882 = scalar_lea.vmem [#allocation2], %s2881
          %2883 = dma.done %s2879, 256
        $region56: #{tpu_custom_call.1} parent=51 // pred_fallthru
          _
      $region52: #{tpu_custom_call.1} parent=5 // pred_fallthru
        _
    $region6: #{tpu_custom_call.1} parent=1 // loop_footer
      %s19 = sadd.s32 1, %s15
    $region7: #{tpu_custom_call.1} parent=1 // loop_footer_branch
      %14 = sbr.rel target = $region3
    $region8: #{tpu_custom_call.1} parent=1 // loop_exit
      _
    %2884 = vsyncpa [#allocation3], 1
    %s2885 = scalar_lea.sflag [#allocation3], 1
    %2886 = vsyncpa %s2885, 1

</llo_original>
